<compile_context>
chip_gen: v7x
topology: tpu7x:2x2x1
jax: 0.10.0
libtpu: 0.0.40
codegen_flags: <defaults>
</compile_context>

<pallas_src>
import jax
import jax.numpy as jnp
from jax import lax
from jax.experimental import pallas as pl
from jax.experimental.pallas import tpu as pltpu


def _round_up(n, m):
    return ((n + m - 1) // m) * m


def _make_geogru_kernel(seq_len, t_chunk, d_pad, unroll):
    """Builds the recurrent kernel; static sizes are closed over."""
    need_tail_mask = (seq_len % t_chunk) != 0

    def kernel(x_ref, wx_ref, b_ref, whur_ref, whh_ref, out_ref, xp_scr):
        c = pl.program_id(1)  # sequence-chunk axis (innermost, "arbitrary")

        @pl.when(c == 0)
        def _init():
            out_ref[...] = jnp.zeros_like(out_ref)

        # ---- fused input projection for this chunk: one MXU matmul over
        #      all t_chunk timesteps (xp never touches HBM) -----------------
        t, bt, ip = x_ref.shape
        xp = (jnp.dot(x_ref[...].reshape(t * bt, ip), wx_ref[...],
                      preferred_element_type=jnp.float32)
              + b_ref[...])                              # (t*bt, 3*Dp)
        xp = xp.reshape(t, bt, 3 * d_pad)

        if need_tail_mask:
            # Padded timesteps: force the u-gate pre-activation to -1e30 so
            # sigmoid(u) == 0 and h_new == h exactly.  One elementwise pass
            # per chunk, outside the serial recurrence.
            step_ids = (c * t_chunk
                        + lax.broadcasted_iota(jnp.int32, (t, 1, 1), 0))
            col = lax.broadcasted_iota(jnp.int32, (1, 1, 3 * d_pad), 2)
            keep = (step_ids < seq_len) | (col >= d_pad)
            xp = jnp.where(keep, xp, -1e30)

        xp_scr[...] = xp

        # Hoisted weight loads (not re-read per unrolled step).
        whur = whur_ref[...]                             # (Dp, 2*Dp)
        whh = whh_ref[...]                               # (Dp, Dp)

        def step(i, h):
            xpi = xp_scr[i]                              # (Bt, 3*Dp)
            # Fused update/reset gate pre-activations: one recurrent matmul.
            hur = (jnp.dot(h, whur, preferred_element_type=jnp.float32)
                   + xpi[:, :2 * d_pad])
            u = jax.nn.sigmoid(hur[:, :d_pad])
            r = jnp.tanh(hur[:, d_pad:])
            # Candidate update (needs r*h, so its matmul stays separate).
            h_upd = jnp.tanh(
                jnp.dot(r * h, whh, preferred_element_type=jnp.float32)
                + xpi[:, 2 * d_pad:])
            return h + u * (h_upd - h)

        out_ref[...] = lax.fori_loop(0, t_chunk, step, out_ref[...],
                                     unroll=unroll)

    return kernel


def geogru_forward(x, params, t_chunk=8):
    """x: [batch, seq, in_dim] float32. Returns final state [batch, out_dim]."""
    B, S, in_dim = x.shape
    out_dim = params["bu"].shape[-1]

    Bp = _round_up(B, 8)            # sublane-aligned batch
    Dp = _round_up(out_dim, 128)    # lane-aligned hidden width
    Ip = _round_up(in_dim, 128)     # lane-aligned input width (zero-padded)

    # Batch-tile grid axis: 2 parallel tiles once there is enough batch to
    # feed v7x's two TensorCores; 1 tile otherwise (neutral on v5e/v6e).
    nb = 2 if Bp >= 16 else 1
    Bt = _round_up(-(-Bp // nb), 8)
    Bp = nb * Bt

    f32 = jnp.float32

    # --- t_chunk bounded by a VMEM budget (v7x-safe: stay well under 64 MiB)
    t_chunk = max(1, min(t_chunk, S))

    def vmem_need(tc):
        return 4 * (2 * tc * Bt * Ip            # x double buffer
                    + 2 * Ip * 3 * Dp           # wx (pipeline-buffered)
                    + 2 * 3 * Dp                # bias
                    + 2 * Dp * 2 * Dp           # whur
                    + 2 * Dp * Dp               # whh
                    + 2 * Bt * Dp               # out (h accumulator)
                    + tc * Bt * 3 * Dp          # xp scratch
                    + 8 * Bt * Dp)              # gate temporaries headroom

    vmem_budget = 48 * 1024 * 1024
    while t_chunk > 1 and vmem_need(t_chunk) > vmem_budget:
        t_chunk = max(1, t_chunk // 2)

    n_chunks = -(-S // t_chunk)
    Sp = n_chunks * t_chunk
    vmem_limit = int(min(vmem_budget,
                         max(2 * vmem_need(t_chunk), 16 * 1024 * 1024)))

    # Unroll bounded by vreg pressure (~6 live (Bt, Dp) f32 temporaries/step).
    unroll = True if 6 * Bt * Dp * 4 <= 128 * 1024 else 2

    # --- weight packing / padding (zero padding is exact: padded h columns
    #     stay 0 through the recurrence, padded rows/steps are sliced off) --
    pad_o = Dp - out_dim
    pad_i = Ip - in_dim
    pad_wx = lambda w: jnp.pad(w.astype(f32), ((0, pad_i), (0, pad_o)))
    pad_wh = lambda w: jnp.pad(w.astype(f32), ((0, pad_o), (0, pad_o)))
    pad_b = lambda b: jnp.pad(b.astype(f32), ((0, 0), (0, pad_o)))

    # Packed input-projection weight / bias: output columns [u | r | h].
    wx_all = jnp.concatenate(
        [pad_wx(params["wxu"]), pad_wx(params["wxr"]), pad_wx(params["wxh"])],
        axis=1)                                           # (Ip, 3*Dp)
    b_all = jnp.concatenate(
        [pad_b(params["bu"]), pad_b(params["br"]), pad_b(params["bh"])],
        axis=1)                                           # (1, 3*Dp)

    # Fused recurrent weights: [Whu | Whr] and Whh.
    whur = jnp.concatenate([pad_wh(params["whu"]), pad_wh(params["whr"])],
                           axis=1)                        # (Dp, 2*Dp)
    whh = pad_wh(params["whh"])                           # (Dp, Dp)

    # Seq-major raw x (tiny: in_dim << 3*Dp), zero-padded to tile sizes.
    x_t = jnp.transpose(x.astype(f32), (1, 0, 2))
    x_t = jnp.pad(x_t, ((0, Sp - S), (0, Bp - B), (0, pad_i)))  # (Sp, Bp, Ip)

    kernel = _make_geogru_kernel(S, t_chunk, Dp, unroll)

    out_p = pl.pallas_call(
        kernel,
        out_shape=jax.ShapeDtypeStruct((Bp, Dp), f32),
        grid=(nb, n_chunks),
        in_specs=[
            pl.BlockSpec((t_chunk, Bt, Ip), lambda b, c: (c, b, 0)),
            pl.BlockSpec((Ip, 3 * Dp), lambda b, c: (0, 0)),
            pl.BlockSpec((1, 3 * Dp), lambda b, c: (0, 0)),
            pl.BlockSpec((Dp, 2 * Dp), lambda b, c: (0, 0)),
            pl.BlockSpec((Dp, Dp), lambda b, c: (0, 0)),
        ],
        out_specs=pl.BlockSpec((Bt, Dp), lambda b, c: (b, 0)),
        scratch_shapes=[pltpu.VMEM((t_chunk, Bt, 3 * Dp), f32)],
        compiler_params=pltpu.CompilerParams(
            dimension_semantics=("parallel", "arbitrary"),
            vmem_limit_bytes=vmem_limit,
        ),
    )(x_t, wx_all, b_all, whur, whh)

    return out_p[:B, :out_dim]


def make_params(key, in_dim, out_dim):
    """Deterministic synthetic parameters, mirroring nn.Linear(in+out, out)."""
    ks = jax.random.split(key, 6)
    scale = 1.0 / jnp.sqrt(float(in_dim + out_dim))

    def lin(kw, kb):
        w = jax.random.uniform(kw, (out_dim, in_dim + out_dim),
                               minval=-scale, maxval=scale, dtype=jnp.float32)
        b = jax.random.uniform(kb, (1, out_dim),
                               minval=-scale, maxval=scale, dtype=jnp.float32)
        # split so y = x @ W[:, :in].T + h @ W[:, in:].T + b
        return w[:, :in_dim].T, w[:, in_dim:].T, b

    wxu, whu, bu = lin(ks[0], ks[1])
    wxr, whr, br = lin(ks[2], ks[3])
    wxh, whh, bh = lin(ks[4], ks[5])
    return dict(wxu=wxu, whu=whu, bu=bu,
                wxr=wxr, whr=whr, br=br,
                wxh=wxh, whh=whh, bh=bh)


def geogru_reference(x, params):
    """Pure-JAX reference matching the PyTorch loop."""
    B, S, _ = x.shape
    out_dim = params["bu"].shape[-1]
    h = jnp.zeros((B, out_dim), jnp.float32)
    for t in range(S):
        xt = x[:, t]
        u = jax.nn.sigmoid(xt @ params["wxu"] + h @ params["whu"] + params["bu"])
        r = jnp.tanh(xt @ params["wxr"] + h @ params["whr"] + params["br"])
        h_upd = jnp.tanh(xt @ params["wxh"] + (r * h) @ params["whh"] + params["bh"])
        h = (1.0 - u) * h + u * h_upd
    return h


if __name__ == "__main__":
    key = jax.random.PRNGKey(0)
    k_x, k_p = jax.random.split(key)

    B, S, in_dim, out_dim = 2, 8, 4, 32
    x = jax.random.normal(k_x, (B, S, in_dim), dtype=jnp.float32)
    params = make_params(k_p, in_dim, out_dim)

    out = geogru_forward(x, params)
    out = jax.block_until_ready(out)

    ref = geogru_reference(x, params)
    if not bool(jnp.allclose(out, ref, atol=1e-5, rtol=1e-5)):
        raise AssertionError("Pallas GeoGRU output mismatch vs JAX reference")

    print("KERNEL_OK")
</pallas_src>

<mosaic_0001>
module attributes {stable_mosaic.version = 11 : i64} {
  func.func @kernel(%arg0: i32, %arg1: i32, %arg2: memref<8x8x128xf32, #tpu.memory_space<vmem>>, %arg3: memref<128x384xf32, #tpu.memory_space<vmem>>, %arg4: memref<1x384xf32, #tpu.memory_space<vmem>>, %arg5: memref<128x256xf32, #tpu.memory_space<vmem>>, %arg6: memref<128x128xf32, #tpu.memory_space<vmem>>, %arg7: memref<8x128xf32, #tpu.memory_space<vmem>>, %arg8: memref<8x8x384xf32, #tpu.memory_space<vmem>>) attributes {dimension_semantics = [#tpu.dimension_semantics<parallel>, #tpu.dimension_semantics<arbitrary>], iteration_bounds = array<i64: 1, 1>, scalar_prefetch = 0 : i64, scratch_operands = 1 : i64, tpu.core_type = #tpu.core_type<tc>, window_params = [{transform_indices = @transform_0, window_bounds = array<i64: 8, 8, 128>}, {pipeline_mode = #tpu.pipeline_mode<synchronous>, transform_indices = @transform_1, window_bounds = array<i64: 128, 384>}, {pipeline_mode = #tpu.pipeline_mode<synchronous>, transform_indices = @transform_2, window_bounds = array<i64: 1, 384>}, {pipeline_mode = #tpu.pipeline_mode<synchronous>, transform_indices = @transform_3, window_bounds = array<i64: 128, 256>}, {pipeline_mode = #tpu.pipeline_mode<synchronous>, transform_indices = @transform_4, window_bounds = array<i64: 128, 128>}, {transform_indices = @transform_5, window_bounds = array<i64: 8, 128>}]} {
    %c0_i32 = arith.constant 0 : i32
    %0 = arith.cmpi eq, %arg1, %c0_i32 : i32
    %1 = arith.extui %0 : i1 to i32
    %c0_i32_0 = arith.constant 0 : i32
    %2 = arith.cmpi ne, %1, %c0_i32_0 : i32
    scf.if %2 {
      %cst_59 = arith.constant 0.000000e+00 : f32
      %192 = vector.broadcast %cst_59 : f32 to vector<8x128xf32>
      %c0_60 = arith.constant 0 : index
      %c0_61 = arith.constant 0 : index
      %193 = vector.load %arg7[%c0_60, %c0_61] : memref<8x128xf32, #tpu.memory_space<vmem>>, vector<8x128xf32>
      tpu.vector_store %arg7[%c0_60, %c0_61], %192 {strides = array<i32>} : memref<8x128xf32, #tpu.memory_space<vmem>>, vector<8x128xf32>,
    } else {
    }
    %c0 = arith.constant 0 : index
    %c0_1 = arith.constant 0 : index
    %c0_2 = arith.constant 0 : index
    %3 = vector.load %arg2[%c0, %c0_1, %c0_2] : memref<8x8x128xf32, #tpu.memory_space<vmem>>, vector<8x8x128xf32>
    %4 = vector.shape_cast %3 : vector<8x8x128xf32> to vector<64x128xf32>
    %c0_3 = arith.constant 0 : index
    %c0_4 = arith.constant 0 : index
    %5 = vector.load %arg3[%c0_3, %c0_4] : memref<128x384xf32, #tpu.memory_space<vmem>>, vector<128x384xf32>
    %cst = arith.constant dense<0.000000e+00> : vector<64x384xf32>
    %6 = tpu.matmul %4, %5, %cst {dimension_numbers = #tpu.dot_dimension_numbers<[1], [0], [0], [1], [0, 0, 1, 1], [], []>} : vector<64x128xf32>, vector<128x384xf32>, vector<64x384xf32> -> vector<64x384xf32>
    %c0_5 = arith.constant 0 : index
    %c0_6 = arith.constant 0 : index
    %7 = vector.load %arg4[%c0_5, %c0_6] : memref<1x384xf32, #tpu.memory_space<vmem>>, vector<1x384xf32>
    %8 = vector.broadcast %7 : vector<1x384xf32> to vector<64x384xf32>
    %9 = arith.addf %6, %8 : vector<64x384xf32>
    %10 = vector.shape_cast %9 : vector<64x384xf32> to vector<8x8x384xf32>
    %c0_7 = arith.constant 0 : index
    %c0_8 = arith.constant 0 : index
    %c0_9 = arith.constant 0 : index
    %11 = vector.load %arg8[%c0_7, %c0_8, %c0_9] : memref<8x8x384xf32, #tpu.memory_space<vmem>>, vector<8x8x384xf32>
    tpu.vector_store %arg8[%c0_7, %c0_8, %c0_9], %10 {strides = array<i32>} : memref<8x8x384xf32, #tpu.memory_space<vmem>>, vector<8x8x384xf32>,
    %c0_10 = arith.constant 0 : index
    %c0_11 = arith.constant 0 : index
    %12 = vector.load %arg5[%c0_10, %c0_11] : memref<128x256xf32, #tpu.memory_space<vmem>>, vector<128x256xf32>
    %c0_12 = arith.constant 0 : index
    %c0_13 = arith.constant 0 : index
    %13 = vector.load %arg6[%c0_12, %c0_13] : memref<128x128xf32, #tpu.memory_space<vmem>>, vector<128x128xf32>
    %c0_14 = arith.constant 0 : index
    %c0_15 = arith.constant 0 : index
    %14 = vector.load %arg7[%c0_14, %c0_15] : memref<8x128xf32, #tpu.memory_space<vmem>>, vector<8x128xf32>
    %c0_i32_16 = arith.constant 0 : i32
    %15 = arith.index_cast %c0_i32_16 : i32 to index
    %c0_17 = arith.constant 0 : index
    %c0_18 = arith.constant 0 : index
    %16 = vector.load %arg8[%15, %c0_17, %c0_18] : memref<8x8x384xf32, #tpu.memory_space<vmem>>, vector<1x8x384xf32>
    %17 = vector.shape_cast %16 : vector<1x8x384xf32> to vector<8x384xf32>
    %cst_19 = arith.constant dense<0.000000e+00> : vector<8x256xf32>
    %18 = tpu.matmul %14, %12, %cst_19 {dimension_numbers = #tpu.dot_dimension_numbers<[1], [0], [0], [1], [0, 0, 1, 1], [], []>} : vector<8x128xf32>, vector<128x256xf32>, vector<8x256xf32> -> vector<8x256xf32>
    %19 = vector.extract_strided_slice %17 {offsets = [0, 0], sizes = [8, 256], strides = [1, 1]} : vector<8x384xf32> to vector<8x256xf32>
    %20 = arith.addf %18, %19 : vector<8x256xf32>
    %21 = vector.extract_strided_slice %20 {offsets = [0, 0], sizes = [8, 128], strides = [1, 1]} : vector<8x256xf32> to vector<8x128xf32>
    %22 = arith.negf %21 : vector<8x128xf32>
    %23 = math.exp %22 : vector<8x128xf32>
    %cst_20 = arith.constant 1.000000e+00 : f32
    %24 = vector.broadcast %cst_20 : f32 to vector<8x128xf32>
    %25 = arith.addf %24, %23 : vector<8x128xf32>
    %26 = arith.divf %24, %25 : vector<8x128xf32>
    %27 = vector.extract_strided_slice %20 {offsets = [0, 128], sizes = [8, 128], strides = [1, 1]} : vector<8x256xf32> to vector<8x128xf32>
    %28 = math.tanh %27 : vector<8x128xf32>
    %29 = arith.mulf %28, %14 : vector<8x128xf32>
    %cst_21 = arith.constant dense<0.000000e+00> : vector<8x128xf32>
    %30 = tpu.matmul %29, %13, %cst_21 {dimension_numbers = #tpu.dot_dimension_numbers<[1], [0], [0], [1], [0, 0, 1, 1], [], []>} : vector<8x128xf32>, vector<128x128xf32>, vector<8x128xf32> -> vector<8x128xf32>
    %31 = vector.extract_strided_slice %17 {offsets = [0, 256], sizes = [8, 128], strides = [1, 1]} : vector<8x384xf32> to vector<8x128xf32>
    %32 = arith.addf %30, %31 : vector<8x128xf32>
    %33 = math.tanh %32 : vector<8x128xf32>
    %34 = arith.subf %33, %14 : vector<8x128xf32>
    %35 = arith.mulf %26, %34 : vector<8x128xf32>
    %36 = arith.addf %14, %35 : vector<8x128xf32>
    %c1_i32 = arith.constant 1 : i32
    %37 = arith.index_cast %c1_i32 : i32 to index
    %c0_22 = arith.constant 0 : index
    %c0_23 = arith.constant 0 : index
    %38 = vector.load %arg8[%37, %c0_22, %c0_23] : memref<8x8x384xf32, #tpu.memory_space<vmem>>, vector<1x8x384xf32>
    %39 = vector.shape_cast %38 : vector<1x8x384xf32> to vector<8x384xf32>
    %cst_24 = arith.constant dense<0.000000e+00> : vector<8x256xf32>
    %40 = tpu.matmul %36, %12, %cst_24 {dimension_numbers = #tpu.dot_dimension_numbers<[1], [0], [0], [1], [0, 0, 1, 1], [], []>} : vector<8x128xf32>, vector<128x256xf32>, vector<8x256xf32> -> vector<8x256xf32>
    %41 = vector.extract_strided_slice %39 {offsets = [0, 0], sizes = [8, 256], strides = [1, 1]} : vector<8x384xf32> to vector<8x256xf32>
    %42 = arith.addf %40, %41 : vector<8x256xf32>
    %43 = vector.extract_strided_slice %42 {offsets = [0, 0], sizes = [8, 128], strides = [1, 1]} : vector<8x256xf32> to vector<8x128xf32>
    %44 = arith.negf %43 : vector<8x128xf32>
    %45 = math.exp %44 : vector<8x128xf32>
    %cst_25 = arith.constant 1.000000e+00 : f32
    %46 = vector.broadcast %cst_25 : f32 to vector<8x128xf32>
    %47 = arith.addf %46, %45 : vector<8x128xf32>
    %48 = arith.divf %46, %47 : vector<8x128xf32>
    %49 = vector.extract_strided_slice %42 {offsets = [0, 128], sizes = [8, 128], strides = [1, 1]} : vector<8x256xf32> to vector<8x128xf32>
    %50 = math.tanh %49 : vector<8x128xf32>
    %51 = arith.mulf %50, %36 : vector<8x128xf32>
    %cst_26 = arith.constant dense<0.000000e+00> : vector<8x128xf32>
    %52 = tpu.matmul %51, %13, %cst_26 {dimension_numbers = #tpu.dot_dimension_numbers<[1], [0], [0], [1], [0, 0, 1, 1], [], []>} : vector<8x128xf32>, vector<128x128xf32>, vector<8x128xf32> -> vector<8x128xf32>
    %53 = vector.extract_strided_slice %39 {offsets = [0, 256], sizes = [8, 128], strides = [1, 1]} : vector<8x384xf32> to vector<8x128xf32>
    %54 = arith.addf %52, %53 : vector<8x128xf32>
    %55 = math.tanh %54 : vector<8x128xf32>
    %56 = arith.subf %55, %36 : vector<8x128xf32>
    %57 = arith.mulf %48, %56 : vector<8x128xf32>
    %58 = arith.addf %36, %57 : vector<8x128xf32>
    %c2_i32 = arith.constant 2 : i32
    %59 = arith.index_cast %c2_i32 : i32 to index
    %c0_27 = arith.constant 0 : index
    %c0_28 = arith.constant 0 : index
    %60 = vector.load %arg8[%59, %c0_27, %c0_28] : memref<8x8x384xf32, #tpu.memory_space<vmem>>, vector<1x8x384xf32>
    %61 = vector.shape_cast %60 : vector<1x8x384xf32> to vector<8x384xf32>
    %cst_29 = arith.constant dense<0.000000e+00> : vector<8x256xf32>
    %62 = tpu.matmul %58, %12, %cst_29 {dimension_numbers = #tpu.dot_dimension_numbers<[1], [0], [0], [1], [0, 0, 1, 1], [], []>} : vector<8x128xf32>, vector<128x256xf32>, vector<8x256xf32> -> vector<8x256xf32>
    %63 = vector.extract_strided_slice %61 {offsets = [0, 0], sizes = [8, 256], strides = [1, 1]} : vector<8x384xf32> to vector<8x256xf32>
    %64 = arith.addf %62, %63 : vector<8x256xf32>
    %65 = vector.extract_strided_slice %64 {offsets = [0, 0], sizes = [8, 128], strides = [1, 1]} : vector<8x256xf32> to vector<8x128xf32>
    %66 = arith.negf %65 : vector<8x128xf32>
    %67 = math.exp %66 : vector<8x128xf32>
    %cst_30 = arith.constant 1.000000e+00 : f32
    %68 = vector.broadcast %cst_30 : f32 to vector<8x128xf32>
    %69 = arith.addf %68, %67 : vector<8x128xf32>
    %70 = arith.divf %68, %69 : vector<8x128xf32>
    %71 = vector.extract_strided_slice %64 {offsets = [0, 128], sizes = [8, 128], strides = [1, 1]} : vector<8x256xf32> to vector<8x128xf32>
    %72 = math.tanh %71 : vector<8x128xf32>
    %73 = arith.mulf %72, %58 : vector<8x128xf32>
    %cst_31 = arith.constant dense<0.000000e+00> : vector<8x128xf32>
    %74 = tpu.matmul %73, %13, %cst_31 {dimension_numbers = #tpu.dot_dimension_numbers<[1], [0], [0], [1], [0, 0, 1, 1], [], []>} : vector<8x128xf32>, vector<128x128xf32>, vector<8x128xf32> -> vector<8x128xf32>
    %75 = vector.extract_strided_slice %61 {offsets = [0, 256], sizes = [8, 128], strides = [1, 1]} : vector<8x384xf32> to vector<8x128xf32>
    %76 = arith.addf %74, %75 : vector<8x128xf32>
    %77 = math.tanh %76 : vector<8x128xf32>
    %78 = arith.subf %77, %58 : vector<8x128xf32>
    %79 = arith.mulf %70, %78 : vector<8x128xf32>
    %80 = arith.addf %58, %79 : vector<8x128xf32>
    %c3_i32 = arith.constant 3 : i32
    %81 = arith.index_cast %c3_i32 : i32 to index
    %c0_32 = arith.constant 0 : index
    %c0_33 = arith.constant 0 : index
    %82 = vector.load %arg8[%81, %c0_32, %c0_33] : memref<8x8x384xf32, #tpu.memory_space<vmem>>, vector<1x8x384xf32>
    %83 = vector.shape_cast %82 : vector<1x8x384xf32> to vector<8x384xf32>
    %cst_34 = arith.constant dense<0.000000e+00> : vector<8x256xf32>
    %84 = tpu.matmul %80, %12, %cst_34 {dimension_numbers = #tpu.dot_dimension_numbers<[1], [0], [0], [1], [0, 0, 1, 1], [], []>} : vector<8x128xf32>, vector<128x256xf32>, vector<8x256xf32> -> vector<8x256xf32>
    %85 = vector.extract_strided_slice %83 {offsets = [0, 0], sizes = [8, 256], strides = [1, 1]} : vector<8x384xf32> to vector<8x256xf32>
    %86 = arith.addf %84, %85 : vector<8x256xf32>
    %87 = vector.extract_strided_slice %86 {offsets = [0, 0], sizes = [8, 128], strides = [1, 1]} : vector<8x256xf32> to vector<8x128xf32>
    %88 = arith.negf %87 : vector<8x128xf32>
    %89 = math.exp %88 : vector<8x128xf32>
    %cst_35 = arith.constant 1.000000e+00 : f32
    %90 = vector.broadcast %cst_35 : f32 to vector<8x128xf32>
    %91 = arith.addf %90, %89 : vector<8x128xf32>
    %92 = arith.divf %90, %91 : vector<8x128xf32>
    %93 = vector.extract_strided_slice %86 {offsets = [0, 128], sizes = [8, 128], strides = [1, 1]} : vector<8x256xf32> to vector<8x128xf32>
    %94 = math.tanh %93 : vector<8x128xf32>
    %95 = arith.mulf %94, %80 : vector<8x128xf32>
    %cst_36 = arith.constant dense<0.000000e+00> : vector<8x128xf32>
    %96 = tpu.matmul %95, %13, %cst_36 {dimension_numbers = #tpu.dot_dimension_numbers<[1], [0], [0], [1], [0, 0, 1, 1], [], []>} : vector<8x128xf32>, vector<128x128xf32>, vector<8x128xf32> -> vector<8x128xf32>
    %97 = vector.extract_strided_slice %83 {offsets = [0, 256], sizes = [8, 128], strides = [1, 1]} : vector<8x384xf32> to vector<8x128xf32>
    %98 = arith.addf %96, %97 : vector<8x128xf32>
    %99 = math.tanh %98 : vector<8x128xf32>
    %100 = arith.subf %99, %80 : vector<8x128xf32>
    %101 = arith.mulf %92, %100 : vector<8x128xf32>
    %102 = arith.addf %80, %101 : vector<8x128xf32>
    %c4_i32 = arith.constant 4 : i32
    %103 = arith.index_cast %c4_i32 : i32 to index
    %c0_37 = arith.constant 0 : index
    %c0_38 = arith.constant 0 : index
    %104 = vector.load %arg8[%103, %c0_37, %c0_38] : memref<8x8x384xf32, #tpu.memory_space<vmem>>, vector<1x8x384xf32>
    %105 = vector.shape_cast %104 : vector<1x8x384xf32> to vector<8x384xf32>
    %cst_39 = arith.constant dense<0.000000e+00> : vector<8x256xf32>
    %106 = tpu.matmul %102, %12, %cst_39 {dimension_numbers = #tpu.dot_dimension_numbers<[1], [0], [0], [1], [0, 0, 1, 1], [], []>} : vector<8x128xf32>, vector<128x256xf32>, vector<8x256xf32> -> vector<8x256xf32>
    %107 = vector.extract_strided_slice %105 {offsets = [0, 0], sizes = [8, 256], strides = [1, 1]} : vector<8x384xf32> to vector<8x256xf32>
    %108 = arith.addf %106, %107 : vector<8x256xf32>
    %109 = vector.extract_strided_slice %108 {offsets = [0, 0], sizes = [8, 128], strides = [1, 1]} : vector<8x256xf32> to vector<8x128xf32>
    %110 = arith.negf %109 : vector<8x128xf32>
    %111 = math.exp %110 : vector<8x128xf32>
    %cst_40 = arith.constant 1.000000e+00 : f32
    %112 = vector.broadcast %cst_40 : f32 to vector<8x128xf32>
    %113 = arith.addf %112, %111 : vector<8x128xf32>
    %114 = arith.divf %112, %113 : vector<8x128xf32>
    %115 = vector.extract_strided_slice %108 {offsets = [0, 128], sizes = [8, 128], strides = [1, 1]} : vector<8x256xf32> to vector<8x128xf32>
    %116 = math.tanh %115 : vector<8x128xf32>
    %117 = arith.mulf %116, %102 : vector<8x128xf32>
    %cst_41 = arith.constant dense<0.000000e+00> : vector<8x128xf32>
    %118 = tpu.matmul %117, %13, %cst_41 {dimension_numbers = #tpu.dot_dimension_numbers<[1], [0], [0], [1], [0, 0, 1, 1], [], []>} : vector<8x128xf32>, vector<128x128xf32>, vector<8x128xf32> -> vector<8x128xf32>
    %119 = vector.extract_strided_slice %105 {offsets = [0, 256], sizes = [8, 128], strides = [1, 1]} : vector<8x384xf32> to vector<8x128xf32>
    %120 = arith.addf %118, %119 : vector<8x128xf32>
    %121 = math.tanh %120 : vector<8x128xf32>
    %122 = arith.subf %121, %102 : vector<8x128xf32>
    %123 = arith.mulf %114, %122 : vector<8x128xf32>
    %124 = arith.addf %102, %123 : vector<8x128xf32>
    %c5_i32 = arith.constant 5 : i32
    %125 = arith.index_cast %c5_i32 : i32 to index
    %c0_42 = arith.constant 0 : index
    %c0_43 = arith.constant 0 : index
    %126 = vector.load %arg8[%125, %c0_42, %c0_43] : memref<8x8x384xf32, #tpu.memory_space<vmem>>, vector<1x8x384xf32>
    %127 = vector.shape_cast %126 : vector<1x8x384xf32> to vector<8x384xf32>
    %cst_44 = arith.constant dense<0.000000e+00> : vector<8x256xf32>
    %128 = tpu.matmul %124, %12, %cst_44 {dimension_numbers = #tpu.dot_dimension_numbers<[1], [0], [0], [1], [0, 0, 1, 1], [], []>} : vector<8x128xf32>, vector<128x256xf32>, vector<8x256xf32> -> vector<8x256xf32>
    %129 = vector.extract_strided_slice %127 {offsets = [0, 0], sizes = [8, 256], strides = [1, 1]} : vector<8x384xf32> to vector<8x256xf32>
    %130 = arith.addf %128, %129 : vector<8x256xf32>
    %131 = vector.extract_strided_slice %130 {offsets = [0, 0], sizes = [8, 128], strides = [1, 1]} : vector<8x256xf32> to vector<8x128xf32>
    %132 = arith.negf %131 : vector<8x128xf32>
    %133 = math.exp %132 : vector<8x128xf32>
    %cst_45 = arith.constant 1.000000e+00 : f32
    %134 = vector.broadcast %cst_45 : f32 to vector<8x128xf32>
    %135 = arith.addf %134, %133 : vector<8x128xf32>
    %136 = arith.divf %134, %135 : vector<8x128xf32>
    %137 = vector.extract_strided_slice %130 {offsets = [0, 128], sizes = [8, 128], strides = [1, 1]} : vector<8x256xf32> to vector<8x128xf32>
    %138 = math.tanh %137 : vector<8x128xf32>
    %139 = arith.mulf %138, %124 : vector<8x128xf32>
    %cst_46 = arith.constant dense<0.000000e+00> : vector<8x128xf32>
    %140 = tpu.matmul %139, %13, %cst_46 {dimension_numbers = #tpu.dot_dimension_numbers<[1], [0], [0], [1], [0, 0, 1, 1], [], []>} : vector<8x128xf32>, vector<128x128xf32>, vector<8x128xf32> -> vector<8x128xf32>
    %141 = vector.extract_strided_slice %127 {offsets = [0, 256], sizes = [8, 128], strides = [1, 1]} : vector<8x384xf32> to vector<8x128xf32>
    %142 = arith.addf %140, %141 : vector<8x128xf32>
    %143 = math.tanh %142 : vector<8x128xf32>
    %144 = arith.subf %143, %124 : vector<8x128xf32>
    %145 = arith.mulf %136, %144 : vector<8x128xf32>
    %146 = arith.addf %124, %145 : vector<8x128xf32>
    %c6_i32 = arith.constant 6 : i32
    %147 = arith.index_cast %c6_i32 : i32 to index
    %c0_47 = arith.constant 0 : index
    %c0_48 = arith.constant 0 : index
    %148 = vector.load %arg8[%147, %c0_47, %c0_48] : memref<8x8x384xf32, #tpu.memory_space<vmem>>, vector<1x8x384xf32>
    %149 = vector.shape_cast %148 : vector<1x8x384xf32> to vector<8x384xf32>
    %cst_49 = arith.constant dense<0.000000e+00> : vector<8x256xf32>
    %150 = tpu.matmul %146, %12, %cst_49 {dimension_numbers = #tpu.dot_dimension_numbers<[1], [0], [0], [1], [0, 0, 1, 1], [], []>} : vector<8x128xf32>, vector<128x256xf32>, vector<8x256xf32> -> vector<8x256xf32>
    %151 = vector.extract_strided_slice %149 {offsets = [0, 0], sizes = [8, 256], strides = [1, 1]} : vector<8x384xf32> to vector<8x256xf32>
    %152 = arith.addf %150, %151 : vector<8x256xf32>
    %153 = vector.extract_strided_slice %152 {offsets = [0, 0], sizes = [8, 128], strides = [1, 1]} : vector<8x256xf32> to vector<8x128xf32>
    %154 = arith.negf %153 : vector<8x128xf32>
    %155 = math.exp %154 : vector<8x128xf32>
    %cst_50 = arith.constant 1.000000e+00 : f32
    %156 = vector.broadcast %cst_50 : f32 to vector<8x128xf32>
    %157 = arith.addf %156, %155 : vector<8x128xf32>
    %158 = arith.divf %156, %157 : vector<8x128xf32>
    %159 = vector.extract_strided_slice %152 {offsets = [0, 128], sizes = [8, 128], strides = [1, 1]} : vector<8x256xf32> to vector<8x128xf32>
    %160 = math.tanh %159 : vector<8x128xf32>
    %161 = arith.mulf %160, %146 : vector<8x128xf32>
    %cst_51 = arith.constant dense<0.000000e+00> : vector<8x128xf32>
    %162 = tpu.matmul %161, %13, %cst_51 {dimension_numbers = #tpu.dot_dimension_numbers<[1], [0], [0], [1], [0, 0, 1, 1], [], []>} : vector<8x128xf32>, vector<128x128xf32>, vector<8x128xf32> -> vector<8x128xf32>
    %163 = vector.extract_strided_slice %149 {offsets = [0, 256], sizes = [8, 128], strides = [1, 1]} : vector<8x384xf32> to vector<8x128xf32>
    %164 = arith.addf %162, %163 : vector<8x128xf32>
    %165 = math.tanh %164 : vector<8x128xf32>
    %166 = arith.subf %165, %146 : vector<8x128xf32>
    %167 = arith.mulf %158, %166 : vector<8x128xf32>
    %168 = arith.addf %146, %167 : vector<8x128xf32>
    %c7_i32 = arith.constant 7 : i32
    %169 = arith.index_cast %c7_i32 : i32 to index
    %c0_52 = arith.constant 0 : index
    %c0_53 = arith.constant 0 : index
    %170 = vector.load %arg8[%169, %c0_52, %c0_53] : memref<8x8x384xf32, #tpu.memory_space<vmem>>, vector<1x8x384xf32>
    %171 = vector.shape_cast %170 : vector<1x8x384xf32> to vector<8x384xf32>
    %cst_54 = arith.constant dense<0.000000e+00> : vector<8x256xf32>
    %172 = tpu.matmul %168, %12, %cst_54 {dimension_numbers = #tpu.dot_dimension_numbers<[1], [0], [0], [1], [0, 0, 1, 1], [], []>} : vector<8x128xf32>, vector<128x256xf32>, vector<8x256xf32> -> vector<8x256xf32>
    %173 = vector.extract_strided_slice %171 {offsets = [0, 0], sizes = [8, 256], strides = [1, 1]} : vector<8x384xf32> to vector<8x256xf32>
    %174 = arith.addf %172, %173 : vector<8x256xf32>
    %175 = vector.extract_strided_slice %174 {offsets = [0, 0], sizes = [8, 128], strides = [1, 1]} : vector<8x256xf32> to vector<8x128xf32>
    %176 = arith.negf %175 : vector<8x128xf32>
    %177 = math.exp %176 : vector<8x128xf32>
    %cst_55 = arith.constant 1.000000e+00 : f32
    %178 = vector.broadcast %cst_55 : f32 to vector<8x128xf32>
    %179 = arith.addf %178, %177 : vector<8x128xf32>
    %180 = arith.divf %178, %179 : vector<8x128xf32>
    %181 = vector.extract_strided_slice %174 {offsets = [0, 128], sizes = [8, 128], strides = [1, 1]} : vector<8x256xf32> to vector<8x128xf32>
    %182 = math.tanh %181 : vector<8x128xf32>
    %183 = arith.mulf %182, %168 : vector<8x128xf32>
    %cst_56 = arith.constant dense<0.000000e+00> : vector<8x128xf32>
    %184 = tpu.matmul %183, %13, %cst_56 {dimension_numbers = #tpu.dot_dimension_numbers<[1], [0], [0], [1], [0, 0, 1, 1], [], []>} : vector<8x128xf32>, vector<128x128xf32>, vector<8x128xf32> -> vector<8x128xf32>
    %185 = vector.extract_strided_slice %171 {offsets = [0, 256], sizes = [8, 128], strides = [1, 1]} : vector<8x384xf32> to vector<8x128xf32>
    %186 = arith.addf %184, %185 : vector<8x128xf32>
    %187 = math.tanh %186 : vector<8x128xf32>
    %188 = arith.subf %187, %168 : vector<8x128xf32>
    %189 = arith.mulf %180, %188 : vector<8x128xf32>
    %190 = arith.addf %168, %189 : vector<8x128xf32>
    %c8_i32 = arith.constant 8 : i32
    %c0_57 = arith.constant 0 : index
    %c0_58 = arith.constant 0 : index
    %191 = vector.load %arg7[%c0_57, %c0_58] : memref<8x128xf32, #tpu.memory_space<vmem>>, vector<8x128xf32>
    tpu.vector_store %arg7[%c0_57, %c0_58], %190 {strides = array<i32>} : memref<8x128xf32, #tpu.memory_space<vmem>>, vector<8x128xf32>,
    return
  }
  func.func @transform_0(%arg0: i32, %arg1: i32) -> (i32, i32, i32) {
    %c0_i32 = arith.constant 0 : i32
    %c0_i32_0 = arith.constant 0 : i32
    return %arg1, %arg0, %c0_i32 : i32, i32, i32
  }
  func.func @transform_1(%arg0: i32, %arg1: i32) -> (i32, i32) {
    %c0_i32 = arith.constant 0 : i32
    %c0_i32_0 = arith.constant 0 : i32
    %c0_i32_1 = arith.constant 0 : i32
    return %c0_i32, %c0_i32_0 : i32, i32
  }
  func.func @transform_2(%arg0: i32, %arg1: i32) -> (i32, i32) {
    %c0_i32 = arith.constant 0 : i32
    %c0_i32_0 = arith.constant 0 : i32
    %c0_i32_1 = arith.constant 0 : i32
    return %c0_i32, %c0_i32_0 : i32, i32
  }
  func.func @transform_3(%arg0: i32, %arg1: i32) -> (i32, i32) {
    %c0_i32 = arith.constant 0 : i32
    %c0_i32_0 = arith.constant 0 : i32
    %c0_i32_1 = arith.constant 0 : i32
    return %c0_i32, %c0_i32_0 : i32, i32
  }
  func.func @transform_4(%arg0: i32, %arg1: i32) -> (i32, i32) {
    %c0_i32 = arith.constant 0 : i32
    %c0_i32_0 = arith.constant 0 : i32
    %c0_i32_1 = arith.constant 0 : i32
    return %c0_i32, %c0_i32_0 : i32, i32
  }
  func.func @transform_5(%arg0: i32, %arg1: i32) -> (i32, i32) {
    %c0_i32 = arith.constant 0 : i32
    %c0_i32_0 = arith.constant 0 : i32
    return %arg0, %c0_i32 : i32, i32
  }
}

</mosaic_0001>

<llo_original>
// kernel: tpu_custom_call.1
$region0: #{tpu_custom_call.1}
  #allocation0 [shape = 'u32[]', space=smem, size = 0x4, offset = 0x4, fixed_abs, tag = 'smem constant byte address 0x4 - core index']
  #allocation1 [shape = 'u32[144,128]{1,0:T(1,128)}', space=vmem, size = 0x12000, scoped, tag = 'internal scratch']
  #allocation2 [shape = 'f32[8,8,384]{2,1,0:T(8,128)}', space=vmem, size = 0x18000, scoped, tag = 'scratch operand']
  %s0 = inlined_call_operand.hbm [shape: f32[8,8,128], index: 0, kind: input, shape index: {}]
  %s1 = inlined_call_operand.hbm [shape: f32[128,384], index: 1, kind: input, shape index: {}]
  %s2 = inlined_call_operand.vmem [shape: f32[1,384], index: 2, kind: input, shape index: {}]
  %s3 = inlined_call_operand.hbm [shape: f32[128,256], index: 3, kind: input, shape index: {}]
  %s4 = inlined_call_operand.hbm [shape: f32[128,128], index: 4, kind: input, shape index: {}]
  %s5 = inlined_call_operand.hbm [shape: f32[8,128], index: 5, kind: output, shape index: {}]
  %s6 = sld [smem:[#allocation0]]
  $region50: #{tpu_custom_call.1} parent=0
    _
  %s8 = ssub.s32 1, %s6
  %s9 = scalar_select 0, %s8, %s6
  $region1: #{tpu_custom_call.1} parent=0
    #allocation3 [shape = 'u8[32768]{0}', space=vmem, size = 0x8000, scoped, tag = 'input window, operand 0, single buffered']
    #allocation4 [shape = 's32[1]{0}', space=sflag, size = 0x4, scoped, tag = 'scoped memory for tpu_custom_call.1']
    #allocation5 [shape = 's32[1]{0}', space=sflag, size = 0x4, scoped, tag = 'scoped memory for tpu_custom_call.1']
    #allocation6 [shape = 'u8[196608]{0}', space=vmem, size = 0x30000, scoped, tag = 'input window, operand 1, single buffered']
    #allocation7 [shape = 's32[1]{0}', space=sflag, size = 0x4, scoped, tag = 'scoped memory for tpu_custom_call.1']
    #allocation8 [shape = 'u8[131072]{0}', space=vmem, size = 0x20000, scoped, tag = 'input window, operand 3, single buffered']
    #allocation9 [shape = 'u8[65536]{0}', space=vmem, size = 0x10000, scoped, tag = 'input window, operand 4, single buffered']
    #allocation10 [shape = 's32[1]{0}', space=sflag, size = 0x4, scoped, tag = 'scoped memory for tpu_custom_call.1']
    #allocation11 [shape = 'u8[4096]{0}', space=vmem, size = 0x1000, scoped, tag = 'output window, operand 0, single buffered']
    %10 = vsyncpa [#allocation4], 0
    %11 = vsyncpa [#allocation7], 0
    %12 = vsyncpa [#allocation10], 0
    %13 = vsyncpa [#allocation5], 0
    // Predicated region
    $region2: #{tpu_custom_call.1} parent=1 // pred_check
      _
    $region3: #{tpu_custom_call.1} parent=1 // pred_check_branch
      %15 = sbr.rel (0) target = $region5
    $region4: #{tpu_custom_call.1} parent=1 // pred_region
      %s17 = ssub.s32 1024, 1024
      %18 = vsyncadd [#allocation4], %s17
      %s19 = sshll.u32 [#allocation3], 4
      %s20 = int_to_ptr.vmem [resolvable:$true] %s19
      %25 = dma.hbm_to_vmem [thread:$0]  %s0, 1024, %s20, [#allocation4], 128, 128, 8
    $region5: #{tpu_custom_call.1} parent=1 // pred_fallthru
      _
    // Predicated region
    $region6: #{tpu_custom_call.1} parent=1 // pred_check
      _
    $region7: #{tpu_custom_call.1} parent=1 // pred_check_branch
      %27 = sbr.rel (0) target = $region9
    $region8: #{tpu_custom_call.1} parent=1 // pred_region
      %s29 = ssub.s32 6144, 6144
      %30 = vsyncadd [#allocation7], %s29
      %s31 = sshll.u32 [#allocation6], 4
      %s32 = int_to_ptr.vmem [resolvable:$true] %s31
      %37 = dma.hbm_to_vmem [thread:$0]  %s1, 6144, %s32, [#allocation7], 384, 384, 24
    $region9: #{tpu_custom_call.1} parent=1 // pred_fallthru
      _
    // Predicated region
    $region10: #{tpu_custom_call.1} parent=1 // pred_check
      _
    $region11: #{tpu_custom_call.1} parent=1 // pred_check_branch
      %39 = sbr.rel (0) target = $region13
    $region12: #{tpu_custom_call.1} parent=1 // pred_region
      _
    $region13: #{tpu_custom_call.1} parent=1 // pred_fallthru
      _
    // Predicated region
    $region14: #{tpu_custom_call.1} parent=1 // pred_check
      _
    $region15: #{tpu_custom_call.1} parent=1 // pred_check_branch
      %41 = sbr.rel (0) target = $region17
    $region16: #{tpu_custom_call.1} parent=1 // pred_region
      %s43 = ssub.s32 4096, 4096
      %44 = vsyncadd [#allocation7], %s43
      %s45 = sshll.u32 [#allocation8], 4
      %s46 = int_to_ptr.vmem [resolvable:$true] %s45
      %51 = dma.hbm_to_vmem [thread:$0]  %s3, 4096, %s46, [#allocation7], 256, 256, 16
    $region17: #{tpu_custom_call.1} parent=1 // pred_fallthru
      _
    // Predicated region
    $region18: #{tpu_custom_call.1} parent=1 // pred_check
      _
    $region19: #{tpu_custom_call.1} parent=1 // pred_check_branch
      %53 = sbr.rel (0) target = $region21
    $region20: #{tpu_custom_call.1} parent=1 // pred_region
      %s55 = ssub.s32 2048, 2048
      %56 = vsyncadd [#allocation10], %s55
      %s57 = sshll.u32 [#allocation9], 4
      %s58 = int_to_ptr.vmem [resolvable:$true] %s57
      %63 = dma.hbm_to_vmem [thread:$0]  %s4, 2048, %s58, [#allocation10], 128, 128, 8
    $region21: #{tpu_custom_call.1} parent=1 // pred_fallthru
      _
    // Predicated region
    $region22: #{tpu_custom_call.1} parent=1 // pred_check
      _
    $region23: #{tpu_custom_call.1} parent=1 // pred_check_branch
      %65 = sbr.rel (0) target = $region25
    $region24: #{tpu_custom_call.1} parent=1 // pred_region
      %66 = dma.done [#allocation4], 1024
    $region25: #{tpu_custom_call.1} parent=1 // pred_fallthru
      _
    // Predicated region
    $region26: #{tpu_custom_call.1} parent=1 // pred_check
      _
    $region27: #{tpu_custom_call.1} parent=1 // pred_check_branch
      %68 = sbr.rel (0) target = $region29
    $region28: #{tpu_custom_call.1} parent=1 // pred_region
      %69 = dma.done [#allocation7], 6144
    $region29: #{tpu_custom_call.1} parent=1 // pred_fallthru
      _
    // Predicated region
    $region30: #{tpu_custom_call.1} parent=1 // pred_check
      _
    $region31: #{tpu_custom_call.1} parent=1 // pred_check_branch
      %71 = sbr.rel (0) target = $region33
    $region32: #{tpu_custom_call.1} parent=1 // pred_region
      %72 = dma.done [#allocation7], 4096
    $region33: #{tpu_custom_call.1} parent=1 // pred_fallthru
      _
    // Predicated region
    $region34: #{tpu_custom_call.1} parent=1 // pred_check
      _
    $region35: #{tpu_custom_call.1} parent=1 // pred_check_branch
      %74 = sbr.rel (0) target = $region37
    $region36: #{tpu_custom_call.1} parent=1 // pred_region
      %75 = dma.done [#allocation10], 2048
    $region37: #{tpu_custom_call.1} parent=1 // pred_fallthru
      _
    %p76 = scmp.eq.s32.totalorder 0, 0
    // Predicated region
    $region38: #{tpu_custom_call.1} parent=1 // pred_check
      %p77 = pneg %p76
    $region39: #{tpu_custom_call.1} parent=1 // pred_check_branch
      %79 = sbr.rel (%p77) target = $region41
    $region40: #{tpu_custom_call.1} parent=1 // pred_region
      %80 = vst [vmem:[#allocation11] sm:$0xff] 0.0
    $region41: #{tpu_custom_call.1} parent=1 // pred_fallthru
      _
    %v81 = vld [vmem:[#allocation3] sm:$0xff]
    %v82 = vld [vmem:[#allocation3 + $0x8] sm:$0xff]
    %v83 = vld [vmem:[#allocation3 + $0x10] sm:$0xff]
    %v84 = vld [vmem:[#allocation3 + $0x18] sm:$0xff]
    %v85 = vld [vmem:[#allocation3 + $0x20] sm:$0xff]
    %v86 = vld [vmem:[#allocation3 + $0x28] sm:$0xff]
    %v87 = vld [vmem:[#allocation3 + $0x30] sm:$0xff]
    %v88 = vld [vmem:[#allocation3 + $0x38] sm:$0xff]
    %v89 = vld [vmem:[#allocation6] sm:$0xff]
    %v90 = vld [vmem:[#allocation6 + $0x8] sm:$0xff]
    %v91 = vld [vmem:[#allocation6 + $0x10] sm:$0xff]
    %v92 = vld [vmem:[#allocation6 + $0x18] sm:$0xff]
    %v93 = vld [vmem:[#allocation6 + $0x20] sm:$0xff]
    %v94 = vld [vmem:[#allocation6 + $0x28] sm:$0xff]
    %v95 = vld [vmem:[#allocation6 + $0x30] sm:$0xff]
    %v96 = vld [vmem:[#allocation6 + $0x38] sm:$0xff]
    %v97 = vld [vmem:[#allocation6 + $0x40] sm:$0xff]
    %v98 = vld [vmem:[#allocation6 + $0x48] sm:$0xff]
    %v99 = vld [vmem:[#allocation6 + $0x50] sm:$0xff]
    %v100 = vld [vmem:[#allocation6 + $0x58] sm:$0xff]
    %v101 = vld [vmem:[#allocation6 + $0x60] sm:$0xff]
    %v102 = vld [vmem:[#allocation6 + $0x68] sm:$0xff]
    %v103 = vld [vmem:[#allocation6 + $0x70] sm:$0xff]
    %v104 = vld [vmem:[#allocation6 + $0x78] sm:$0xff]
    %v105 = vld [vmem:[#allocation6 + $0x80] sm:$0xff]
    %v106 = vld [vmem:[#allocation6 + $0x88] sm:$0xff]
    %v107 = vld [vmem:[#allocation6 + $0x90] sm:$0xff]
    %v108 = vld [vmem:[#allocation6 + $0x98] sm:$0xff]
    %v109 = vld [vmem:[#allocation6 + $0xa0] sm:$0xff]
    %v110 = vld [vmem:[#allocation6 + $0xa8] sm:$0xff]
    %v111 = vld [vmem:[#allocation6 + $0xb0] sm:$0xff]
    %v112 = vld [vmem:[#allocation6 + $0xb8] sm:$0xff]
    %v113 = vld [vmem:[#allocation6 + $0xc0] sm:$0xff]
    %v114 = vld [vmem:[#allocation6 + $0xc8] sm:$0xff]
    %v115 = vld [vmem:[#allocation6 + $0xd0] sm:$0xff]
    %v116 = vld [vmem:[#allocation6 + $0xd8] sm:$0xff]
    %v117 = vld [vmem:[#allocation6 + $0xe0] sm:$0xff]
    %v118 = vld [vmem:[#allocation6 + $0xe8] sm:$0xff]
    %v119 = vld [vmem:[#allocation6 + $0xf0] sm:$0xff]
    %v120 = vld [vmem:[#allocation6 + $0xf8] sm:$0xff]
    %v121 = vld [vmem:[#allocation6 + $0x100] sm:$0xff]
    %v122 = vld [vmem:[#allocation6 + $0x108] sm:$0xff]
    %v123 = vld [vmem:[#allocation6 + $0x110] sm:$0xff]
    %v124 = vld [vmem:[#allocation6 + $0x118] sm:$0xff]
    %v125 = vld [vmem:[#allocation6 + $0x120] sm:$0xff]
    %v126 = vld [vmem:[#allocation6 + $0x128] sm:$0xff]
    %v127 = vld [vmem:[#allocation6 + $0x130] sm:$0xff]
    %v128 = vld [vmem:[#allocation6 + $0x138] sm:$0xff]
    %v129 = vld [vmem:[#allocation6 + $0x140] sm:$0xff]
    %v130 = vld [vmem:[#allocation6 + $0x148] sm:$0xff]
    %v131 = vld [vmem:[#allocation6 + $0x150] sm:$0xff]
    %v132 = vld [vmem:[#allocation6 + $0x158] sm:$0xff]
    %v133 = vld [vmem:[#allocation6 + $0x160] sm:$0xff]
    %v134 = vld [vmem:[#allocation6 + $0x168] sm:$0xff]
    %v135 = vld [vmem:[#allocation6 + $0x170] sm:$0xff]
    %v136 = vld [vmem:[#allocation6 + $0x178] sm:$0xff]
    %v137 = vld [vmem:[%s2] sm:$0x7]
    %v139 = vlaneseq
    %v140 = vshrl.u32 %v139, 7
    %v141 = vsub.s32 0, %v140
    %v142 = vrot.slane %v137, %v141
    %v143 = vlaneseq
    %v144 = vshrl.u32 %v143, 7
    %v145 = vsub.s32 1, %v144
    %v146 = vrot.slane %v137, %v145
    %v147 = vlaneseq
    %v148 = vshrl.u32 %v147, 7
    %v149 = vsub.s32 2, %v148
    %v150 = vrot.slane %v137, %v149
    %154 = vmatprep.subr.mxu0 %v90
    %155 = vmatpush1.msra.mxu0 %v89
    %156 = vmatprep.subr.mxu0 %v93
    %157 = vmatpush1.msra.mxu0 %v92
    %158 = vmatprep.subr.mxu0 %v96
    %159 = vmatpush1.msra.mxu0 %v95
    %160 = vmatprep.subr.mxu0 %v99
    %161 = vmatpush1.msra.mxu0 %v98
    %162 = vmatprep.subr.mxu0 %v102
    %163 = vmatpush1.msra.mxu0 %v101
    %164 = vmatprep.subr.mxu0 %v105
    %165 = vmatpush1.msra.mxu0 %v104
    %166 = vmatprep.subr.mxu0 %v108
    %167 = vmatpush1.msra.mxu0 %v107
    %168 = vmatprep.subr.mxu0 %v111
    %169 = vmatpush1.msra.mxu0 %v110
    %170 = vmatprep.subr.mxu0 %v114
    %171 = vmatpush1.msra.mxu0 %v113
    %172 = vmatprep.subr.mxu0 %v117
    %173 = vmatpush1.msra.mxu0 %v116
    %174 = vmatprep.subr.mxu0 %v120
    %175 = vmatpush1.msra.mxu0 %v119
    %176 = vmatprep.subr.mxu0 %v123
    %177 = vmatpush1.msra.mxu0 %v122
    %178 = vmatprep.subr.mxu0 %v126
    %179 = vmatpush1.msra.mxu0 %v125
    %180 = vmatprep.subr.mxu0 %v129
    %181 = vmatpush1.msra.mxu0 %v128
    %182 = vmatprep.subr.mxu0 %v132
    %183 = vmatpush1.msra.mxu0 %v131
    %184 = vmatprep.subr.mxu0 %v135
    %185 = vmatpush1.msra.mxu0 %v134
    %186 = vmatprep.subr.mxu0 0.0
    %187 = vmatpush1.msra.mxu0 0.0
    %188 = vmatprep.subr.mxu0 0.0
    %189 = vmatpush1.msra.mxu0 0.0
    %190 = vmatprep.subr.mxu0 0.0
    %191 = vmatpush1.msra.mxu0 0.0
    %192 = vmatprep.subr.mxu0 0.0
    %193 = vmatpush1.msra.mxu0 0.0
    %194 = vmatprep.subr.mxu0 0.0
    %195 = vmatpush1.msra.mxu0 0.0
    %196 = vmatprep.subr.mxu0 0.0
    %197 = vmatpush1.msra.mxu0 0.0
    %198 = vmatprep.subr.mxu0 0.0
    %199 = vmatpush1.msra.mxu0 0.0
    %200 = vmatprep.subr.mxu0 0.0
    %201 = vmatpush1.msra.mxu0 0.0
    %202 = vmatprep.subr.mxu0 0.0
    %203 = vmatpush1.msra.mxu0 0.0
    %204 = vmatprep.subr.mxu0 0.0
    %205 = vmatpush1.msra.mxu0 0.0
    %206 = vmatprep.subr.mxu0 0.0
    %207 = vmatpush1.msra.mxu0 0.0
    %208 = vmatprep.subr.mxu0 0.0
    %209 = vmatpush1.msra.mxu0 0.0
    %210 = vmatprep.subr.mxu0 0.0
    %211 = vmatpush1.msra.mxu0 0.0
    %212 = vmatprep.subr.mxu0 0.0
    %213 = vmatpush1.msra.mxu0 0.0
    %214 = vmatprep.subr.mxu0 0.0
    %215 = vmatpush1.msra.mxu0 0.0
    %216 = vmatprep.subr.mxu0 0.0
    %217 = vmatpush1.msra.mxu0 0.0
    %218 = vmatprep.mubr.f32.mxu0 0.0
    %219 = vmatmul.mubr.f32.gmra.mrb[0].mxu0 %v81
    %v220 = vpop.f32.mrb[0].mxu0
    %v221 = vadd.f32 %v142, %v220
    %v222 = vpop.f32.mrb[0].mxu0
    %v223 = vadd.f32 %v146, %v222
    %224 = vmatprep.mubr.f32.mxu0 0.0
    %225 = vmatmul.mubr.f32.gmra.mrb[0].mxu0 %v82
    %v226 = vpop.f32.mrb[0].mxu0
    %v227 = vadd.f32 %v142, %v226
    %v228 = vpop.f32.mrb[0].mxu0
    %v229 = vadd.f32 %v146, %v228
    %230 = vmatprep.mubr.f32.mxu0 0.0
    %231 = vmatmul.mubr.f32.gmra.mrb[0].mxu0 %v83
    %v232 = vpop.f32.mrb[0].mxu0
    %v233 = vadd.f32 %v142, %v232
    %v234 = vpop.f32.mrb[0].mxu0
    %v235 = vadd.f32 %v146, %v234
    %236 = vmatprep.mubr.f32.mxu0 0.0
    %237 = vmatmul.mubr.f32.gmra.mrb[0].mxu0 %v84
    %v238 = vpop.f32.mrb[0].mxu0
    %v239 = vadd.f32 %v142, %v238
    %v240 = vpop.f32.mrb[0].mxu0
    %v241 = vadd.f32 %v146, %v240
    %242 = vmatprep.mubr.f32.mxu0 0.0
    %243 = vmatmul.mubr.f32.gmra.mrb[0].mxu0 %v85
    %v244 = vpop.f32.mrb[0].mxu0
    %v245 = vadd.f32 %v142, %v244
    %v246 = vpop.f32.mrb[0].mxu0
    %v247 = vadd.f32 %v146, %v246
    %248 = vmatprep.mubr.f32.mxu0 0.0
    %249 = vmatmul.mubr.f32.gmra.mrb[0].mxu0 %v86
    %v250 = vpop.f32.mrb[0].mxu0
    %v251 = vadd.f32 %v142, %v250
    %v252 = vpop.f32.mrb[0].mxu0
    %v253 = vadd.f32 %v146, %v252
    %254 = vmatprep.mubr.f32.mxu0 0.0
    %255 = vmatmul.mubr.f32.gmra.mrb[0].mxu0 %v87
    %v256 = vpop.f32.mrb[0].mxu0
    %v257 = vadd.f32 %v142, %v256
    %v258 = vpop.f32.mrb[0].mxu0
    %v259 = vadd.f32 %v146, %v258
    %260 = vmatprep.mubr.f32.mxu0 0.0
    %261 = vmatmul.mubr.f32.gmra.mrb[0].mxu0 %v88
    %v262 = vpop.f32.mrb[0].mxu0
    %v263 = vadd.f32 %v142, %v262
    %v264 = vpop.f32.mrb[0].mxu0
    %v265 = vadd.f32 %v146, %v264
    %266 = vdwg.mxu0
    %267 = vmatprep.subr.mxu0 0.0
    %268 = vmatpush1.msra.mxu0 %v91
    %269 = vmatprep.subr.mxu0 0.0
    %270 = vmatpush1.msra.mxu0 %v94
    %271 = vmatprep.subr.mxu0 0.0
    %272 = vmatpush1.msra.mxu0 %v97
    %273 = vmatprep.subr.mxu0 0.0
    %274 = vmatpush1.msra.mxu0 %v100
    %275 = vmatprep.subr.mxu0 0.0
    %276 = vmatpush1.msra.mxu0 %v103
    %277 = vmatprep.subr.mxu0 0.0
    %278 = vmatpush1.msra.mxu0 %v106
    %279 = vmatprep.subr.mxu0 0.0
    %280 = vmatpush1.msra.mxu0 %v109
    %281 = vmatprep.subr.mxu0 0.0
    %282 = vmatpush1.msra.mxu0 %v112
    %283 = vmatprep.subr.mxu0 0.0
    %284 = vmatpush1.msra.mxu0 %v115
    %285 = vmatprep.subr.mxu0 0.0
    %286 = vmatpush1.msra.mxu0 %v118
    %287 = vmatprep.subr.mxu0 0.0
    %288 = vmatpush1.msra.mxu0 %v121
    %289 = vmatprep.subr.mxu0 0.0
    %290 = vmatpush1.msra.mxu0 %v124
    %291 = vmatprep.subr.mxu0 0.0
    %292 = vmatpush1.msra.mxu0 %v127
    %293 = vmatprep.subr.mxu0 0.0
    %294 = vmatpush1.msra.mxu0 %v130
    %295 = vmatprep.subr.mxu0 0.0
    %296 = vmatpush1.msra.mxu0 %v133
    %297 = vmatprep.subr.mxu0 0.0
    %298 = vmatpush1.msra.mxu0 %v136
    %299 = vmatprep.subr.mxu0 0.0
    %300 = vmatpush1.msra.mxu0 0.0
    %301 = vmatprep.subr.mxu0 0.0
    %302 = vmatpush1.msra.mxu0 0.0
    %303 = vmatprep.subr.mxu0 0.0
    %304 = vmatpush1.msra.mxu0 0.0
    %305 = vmatprep.subr.mxu0 0.0
    %306 = vmatpush1.msra.mxu0 0.0
    %307 = vmatprep.subr.mxu0 0.0
    %308 = vmatpush1.msra.mxu0 0.0
    %309 = vmatprep.subr.mxu0 0.0
    %310 = vmatpush1.msra.mxu0 0.0
    %311 = vmatprep.subr.mxu0 0.0
    %312 = vmatpush1.msra.mxu0 0.0
    %313 = vmatprep.subr.mxu0 0.0
    %314 = vmatpush1.msra.mxu0 0.0
    %315 = vmatprep.subr.mxu0 0.0
    %316 = vmatpush1.msra.mxu0 0.0
    %317 = vmatprep.subr.mxu0 0.0
    %318 = vmatpush1.msra.mxu0 0.0
    %319 = vmatprep.subr.mxu0 0.0
    %320 = vmatpush1.msra.mxu0 0.0
    %321 = vmatprep.subr.mxu0 0.0
    %322 = vmatpush1.msra.mxu0 0.0
    %323 = vmatprep.subr.mxu0 0.0
    %324 = vmatpush1.msra.mxu0 0.0
    %325 = vmatprep.subr.mxu0 0.0
    %326 = vmatpush1.msra.mxu0 0.0
    %327 = vmatprep.subr.mxu0 0.0
    %328 = vmatpush1.msra.mxu0 0.0
    %329 = vmatprep.subr.mxu0 0.0
    %330 = vmatpush1.msra.mxu0 0.0
    %331 = vmatprep.mubr.f32.mxu0 0.0
    %332 = vmatmul.mubr.f32.gmra.mrb[0].mxu0 %v81
    %v333 = vpop.f32.mrb[0].mxu0
    %v334 = vadd.f32 %v150, %v333
    %v335 = vpop.f32.mrb[0].mxu0
    %336 = vmatprep.mubr.f32.mxu0 0.0
    %337 = vmatmul.mubr.f32.gmra.mrb[0].mxu0 %v82
    %v338 = vpop.f32.mrb[0].mxu0
    %v339 = vadd.f32 %v150, %v338
    %v340 = vpop.f32.mrb[0].mxu0
    %341 = vmatprep.mubr.f32.mxu0 0.0
    %342 = vmatmul.mubr.f32.gmra.mrb[0].mxu0 %v83
    %v343 = vpop.f32.mrb[0].mxu0
    %v344 = vadd.f32 %v150, %v343
    %v345 = vpop.f32.mrb[0].mxu0
    %346 = vmatprep.mubr.f32.mxu0 0.0
    %347 = vmatmul.mubr.f32.gmra.mrb[0].mxu0 %v84
    %v348 = vpop.f32.mrb[0].mxu0
    %v349 = vadd.f32 %v150, %v348
    %v350 = vpop.f32.mrb[0].mxu0
    %351 = vmatprep.mubr.f32.mxu0 0.0
    %352 = vmatmul.mubr.f32.gmra.mrb[0].mxu0 %v85
    %v353 = vpop.f32.mrb[0].mxu0
    %v354 = vadd.f32 %v150, %v353
    %v355 = vpop.f32.mrb[0].mxu0
    %356 = vmatprep.mubr.f32.mxu0 0.0
    %357 = vmatmul.mubr.f32.gmra.mrb[0].mxu0 %v86
    %v358 = vpop.f32.mrb[0].mxu0
    %v359 = vadd.f32 %v150, %v358
    %v360 = vpop.f32.mrb[0].mxu0
    %361 = vmatprep.mubr.f32.mxu0 0.0
    %362 = vmatmul.mubr.f32.gmra.mrb[0].mxu0 %v87
    %v363 = vpop.f32.mrb[0].mxu0
    %v364 = vadd.f32 %v150, %v363
    %v365 = vpop.f32.mrb[0].mxu0
    %366 = vmatprep.mubr.f32.mxu0 0.0
    %367 = vmatmul.mubr.f32.gmra.mrb[0].mxu0 %v88
    %v368 = vpop.f32.mrb[0].mxu0
    %v369 = vadd.f32 %v150, %v368
    %v370 = vpop.f32.mrb[0].mxu0
    %371 = vdwg.mxu0
    %372 = vst [vmem:[#allocation2] sm:$0xff] %v221
    %373 = vst [vmem:[#allocation2 + $0x8] sm:$0xff] %v223
    %374 = vst [vmem:[#allocation2 + $0x10] sm:$0xff] %v334
    %375 = vst [vmem:[#allocation2 + $0x18] sm:$0xff] %v227
    %376 = vst [vmem:[#allocation2 + $0x20] sm:$0xff] %v229
    %377 = vst [vmem:[#allocation2 + $0x28] sm:$0xff] %v339
    %378 = vst [vmem:[#allocation2 + $0x30] sm:$0xff] %v233
    %379 = vst [vmem:[#allocation2 + $0x38] sm:$0xff] %v235
    %380 = vst [vmem:[#allocation2 + $0x40] sm:$0xff] %v344
    %381 = vst [vmem:[#allocation2 + $0x48] sm:$0xff] %v239
    %382 = vst [vmem:[#allocation2 + $0x50] sm:$0xff] %v241
    %383 = vst [vmem:[#allocation2 + $0x58] sm:$0xff] %v349
    %384 = vst [vmem:[#allocation2 + $0x60] sm:$0xff] %v245
    %385 = vst [vmem:[#allocation2 + $0x68] sm:$0xff] %v247
    %386 = vst [vmem:[#allocation2 + $0x70] sm:$0xff] %v354
    %387 = vst [vmem:[#allocation2 + $0x78] sm:$0xff] %v251
    %388 = vst [vmem:[#allocation2 + $0x80] sm:$0xff] %v253
    %389 = vst [vmem:[#allocation2 + $0x88] sm:$0xff] %v359
    %390 = vst [vmem:[#allocation2 + $0x90] sm:$0xff] %v257
    %391 = vst [vmem:[#allocation2 + $0x98] sm:$0xff] %v259
    %392 = vst [vmem:[#allocation2 + $0xa0] sm:$0xff] %v364
    %393 = vst [vmem:[#allocation2 + $0xa8] sm:$0xff] %v263
    %394 = vst [vmem:[#allocation2 + $0xb0] sm:$0xff] %v265
    %395 = vst [vmem:[#allocation2 + $0xb8] sm:$0xff] %v369
    %v396 = vld [vmem:[#allocation8] sm:$0xff]
    %v397 = vld [vmem:[#allocation8 + $0x8] sm:$0xff]
    %v398 = vld [vmem:[#allocation8 + $0x10] sm:$0xff]
    %v399 = vld [vmem:[#allocation8 + $0x18] sm:$0xff]
    %v400 = vld [vmem:[#allocation8 + $0x20] sm:$0xff]
    %v401 = vld [vmem:[#allocation8 + $0x28] sm:$0xff]
    %v402 = vld [vmem:[#allocation8 + $0x30] sm:$0xff]
    %v403 = vld [vmem:[#allocation8 + $0x38] sm:$0xff]
    %v404 = vld [vmem:[#allocation8 + $0x40] sm:$0xff]
    %v405 = vld [vmem:[#allocation8 + $0x48] sm:$0xff]
    %v406 = vld [vmem:[#allocation8 + $0x50] sm:$0xff]
    %v407 = vld [vmem:[#allocation8 + $0x58] sm:$0xff]
    %v408 = vld [vmem:[#allocation8 + $0x60] sm:$0xff]
    %v409 = vld [vmem:[#allocation8 + $0x68] sm:$0xff]
    %v410 = vld [vmem:[#allocation8 + $0x70] sm:$0xff]
    %v411 = vld [vmem:[#allocation8 + $0x78] sm:$0xff]
    %v412 = vld [vmem:[#allocation8 + $0x80] sm:$0xff]
    %v413 = vld [vmem:[#allocation8 + $0x88] sm:$0xff]
    %v414 = vld [vmem:[#allocation8 + $0x90] sm:$0xff]
    %v415 = vld [vmem:[#allocation8 + $0x98] sm:$0xff]
    %v416 = vld [vmem:[#allocation8 + $0xa0] sm:$0xff]
    %v417 = vld [vmem:[#allocation8 + $0xa8] sm:$0xff]
    %v418 = vld [vmem:[#allocation8 + $0xb0] sm:$0xff]
    %v419 = vld [vmem:[#allocation8 + $0xb8] sm:$0xff]
    %v420 = vld [vmem:[#allocation8 + $0xc0] sm:$0xff]
    %v421 = vld [vmem:[#allocation8 + $0xc8] sm:$0xff]
    %v422 = vld [vmem:[#allocation8 + $0xd0] sm:$0xff]
    %v423 = vld [vmem:[#allocation8 + $0xd8] sm:$0xff]
    %v424 = vld [vmem:[#allocation8 + $0xe0] sm:$0xff]
    %v425 = vld [vmem:[#allocation8 + $0xe8] sm:$0xff]
    %v426 = vld [vmem:[#allocation8 + $0xf0] sm:$0xff]
    %v427 = vld [vmem:[#allocation8 + $0xf8] sm:$0xff]
    %v428 = vld [vmem:[#allocation9] sm:$0xff]
    %v429 = vld [vmem:[#allocation9 + $0x8] sm:$0xff]
    %v430 = vld [vmem:[#allocation9 + $0x10] sm:$0xff]
    %v431 = vld [vmem:[#allocation9 + $0x18] sm:$0xff]
    %v432 = vld [vmem:[#allocation9 + $0x20] sm:$0xff]
    %v433 = vld [vmem:[#allocation9 + $0x28] sm:$0xff]
    %v434 = vld [vmem:[#allocation9 + $0x30] sm:$0xff]
    %v435 = vld [vmem:[#allocation9 + $0x38] sm:$0xff]
    %v436 = vld [vmem:[#allocation9 + $0x40] sm:$0xff]
    %v437 = vld [vmem:[#allocation9 + $0x48] sm:$0xff]
    %v438 = vld [vmem:[#allocation9 + $0x50] sm:$0xff]
    %v439 = vld [vmem:[#allocation9 + $0x58] sm:$0xff]
    %v440 = vld [vmem:[#allocation9 + $0x60] sm:$0xff]
    %v441 = vld [vmem:[#allocation9 + $0x68] sm:$0xff]
    %v442 = vld [vmem:[#allocation9 + $0x70] sm:$0xff]
    %v443 = vld [vmem:[#allocation9 + $0x78] sm:$0xff]
    %v444 = vld [vmem:[#allocation11] sm:$0xff]
    %v445 = vld [vmem:[#allocation2] sm:$0xff]
    %v446 = vld [vmem:[#allocation2 + $0x8] sm:$0xff]
    %v447 = vld [vmem:[#allocation2 + $0x10] sm:$0xff]
    %448 = vmatprep.subr.mxu0 %v397
    %449 = vmatpush1.msra.mxu0 %v396
    %450 = vmatprep.subr.mxu0 %v399
    %451 = vmatpush1.msra.mxu0 %v398
    %452 = vmatprep.subr.mxu0 %v401
    %453 = vmatpush1.msra.mxu0 %v400
    %454 = vmatprep.subr.mxu0 %v403
    %455 = vmatpush1.msra.mxu0 %v402
    %456 = vmatprep.subr.mxu0 %v405
    %457 = vmatpush1.msra.mxu0 %v404
    %458 = vmatprep.subr.mxu0 %v407
    %459 = vmatpush1.msra.mxu0 %v406
    %460 = vmatprep.subr.mxu0 %v409
    %461 = vmatpush1.msra.mxu0 %v408
    %462 = vmatprep.subr.mxu0 %v411
    %463 = vmatpush1.msra.mxu0 %v410
    %464 = vmatprep.subr.mxu0 %v413
    %465 = vmatpush1.msra.mxu0 %v412
    %466 = vmatprep.subr.mxu0 %v415
    %467 = vmatpush1.msra.mxu0 %v414
    %468 = vmatprep.subr.mxu0 %v417
    %469 = vmatpush1.msra.mxu0 %v416
    %470 = vmatprep.subr.mxu0 %v419
    %471 = vmatpush1.msra.mxu0 %v418
    %472 = vmatprep.subr.mxu0 %v421
    %473 = vmatpush1.msra.mxu0 %v420
    %474 = vmatprep.subr.mxu0 %v423
    %475 = vmatpush1.msra.mxu0 %v422
    %476 = vmatprep.subr.mxu0 %v425
    %477 = vmatpush1.msra.mxu0 %v424
    %478 = vmatprep.subr.mxu0 %v427
    %479 = vmatpush1.msra.mxu0 %v426
    %480 = vmatprep.subr.mxu0 0.0
    %481 = vmatpush1.msra.mxu0 0.0
    %482 = vmatprep.subr.mxu0 0.0
    %483 = vmatpush1.msra.mxu0 0.0
    %484 = vmatprep.subr.mxu0 0.0
    %485 = vmatpush1.msra.mxu0 0.0
    %486 = vmatprep.subr.mxu0 0.0
    %487 = vmatpush1.msra.mxu0 0.0
    %488 = vmatprep.subr.mxu0 0.0
    %489 = vmatpush1.msra.mxu0 0.0
    %490 = vmatprep.subr.mxu0 0.0
    %491 = vmatpush1.msra.mxu0 0.0
    %492 = vmatprep.subr.mxu0 0.0
    %493 = vmatpush1.msra.mxu0 0.0
    %494 = vmatprep.subr.mxu0 0.0
    %495 = vmatpush1.msra.mxu0 0.0
    %496 = vmatprep.subr.mxu0 0.0
    %497 = vmatpush1.msra.mxu0 0.0
    %498 = vmatprep.subr.mxu0 0.0
    %499 = vmatpush1.msra.mxu0 0.0
    %500 = vmatprep.subr.mxu0 0.0
    %501 = vmatpush1.msra.mxu0 0.0
    %502 = vmatprep.subr.mxu0 0.0
    %503 = vmatpush1.msra.mxu0 0.0
    %504 = vmatprep.subr.mxu0 0.0
    %505 = vmatpush1.msra.mxu0 0.0
    %506 = vmatprep.subr.mxu0 0.0
    %507 = vmatpush1.msra.mxu0 0.0
    %508 = vmatprep.subr.mxu0 0.0
    %509 = vmatpush1.msra.mxu0 0.0
    %510 = vmatprep.subr.mxu0 0.0
    %511 = vmatpush1.msra.mxu0 0.0
    %512 = vmatprep.mubr.f32.mxu0 0.0
    %513 = vmatmul.mubr.f32.gmra.mrb[0].mxu0 %v444
    %v514 = vpop.f32.mrb[0].mxu0
    %v515 = vadd.f32 %v445, %v514
    %v516 = vpop.f32.mrb[0].mxu0
    %v517 = vadd.f32 %v446, %v516
    %518 = vdwg.mxu0
    %v519 = vxor.u32 %v515, 2147483648
    %v520 = vmul.f32 %v519, 1.442695
    %v521 = vpow.pop %v520
    %v522 = vadd.f32 %v521, 1.0
    %v523 = vrcp.pop %v522
    %v524 = vmul.f32 1.0, %v523
    %v525 = vtanh.pop %v517
    %v526 = vmul.f32 %v525, %v444
    %527 = vmatprep.subr.mxu0 0.0
    %528 = vmatpush1.msra.mxu0 %v428
    %529 = vmatprep.subr.mxu0 0.0
    %530 = vmatpush1.msra.mxu0 %v429
    %531 = vmatprep.subr.mxu0 0.0
    %532 = vmatpush1.msra.mxu0 %v430
    %533 = vmatprep.subr.mxu0 0.0
    %534 = vmatpush1.msra.mxu0 %v431
    %535 = vmatprep.subr.mxu0 0.0
    %536 = vmatpush1.msra.mxu0 %v432
    %537 = vmatprep.subr.mxu0 0.0
    %538 = vmatpush1.msra.mxu0 %v433
    %539 = vmatprep.subr.mxu0 0.0
    %540 = vmatpush1.msra.mxu0 %v434
    %541 = vmatprep.subr.mxu0 0.0
    %542 = vmatpush1.msra.mxu0 %v435
    %543 = vmatprep.subr.mxu0 0.0
    %544 = vmatpush1.msra.mxu0 %v436
    %545 = vmatprep.subr.mxu0 0.0
    %546 = vmatpush1.msra.mxu0 %v437
    %547 = vmatprep.subr.mxu0 0.0
    %548 = vmatpush1.msra.mxu0 %v438
    %549 = vmatprep.subr.mxu0 0.0
    %550 = vmatpush1.msra.mxu0 %v439
    %551 = vmatprep.subr.mxu0 0.0
    %552 = vmatpush1.msra.mxu0 %v440
    %553 = vmatprep.subr.mxu0 0.0
    %554 = vmatpush1.msra.mxu0 %v441
    %555 = vmatprep.subr.mxu0 0.0
    %556 = vmatpush1.msra.mxu0 %v442
    %557 = vmatprep.subr.mxu0 0.0
    %558 = vmatpush1.msra.mxu0 %v443
    %559 = vmatprep.subr.mxu0 0.0
    %560 = vmatpush1.msra.mxu0 0.0
    %561 = vmatprep.subr.mxu0 0.0
    %562 = vmatpush1.msra.mxu0 0.0
    %563 = vmatprep.subr.mxu0 0.0
    %564 = vmatpush1.msra.mxu0 0.0
    %565 = vmatprep.subr.mxu0 0.0
    %566 = vmatpush1.msra.mxu0 0.0
    %567 = vmatprep.subr.mxu0 0.0
    %568 = vmatpush1.msra.mxu0 0.0
    %569 = vmatprep.subr.mxu0 0.0
    %570 = vmatpush1.msra.mxu0 0.0
    %571 = vmatprep.subr.mxu0 0.0
    %572 = vmatpush1.msra.mxu0 0.0
    %573 = vmatprep.subr.mxu0 0.0
    %574 = vmatpush1.msra.mxu0 0.0
    %575 = vmatprep.subr.mxu0 0.0
    %576 = vmatpush1.msra.mxu0 0.0
    %577 = vmatprep.subr.mxu0 0.0
    %578 = vmatpush1.msra.mxu0 0.0
    %579 = vmatprep.subr.mxu0 0.0
    %580 = vmatpush1.msra.mxu0 0.0
    %581 = vmatprep.subr.mxu0 0.0
    %582 = vmatpush1.msra.mxu0 0.0
    %583 = vmatprep.subr.mxu0 0.0
    %584 = vmatpush1.msra.mxu0 0.0
    %585 = vmatprep.subr.mxu0 0.0
    %586 = vmatpush1.msra.mxu0 0.0
    %587 = vmatprep.subr.mxu0 0.0
    %588 = vmatpush1.msra.mxu0 0.0
    %589 = vmatprep.subr.mxu0 0.0
    %590 = vmatpush1.msra.mxu0 0.0
    %591 = vmatprep.mubr.f32.mxu0 0.0
    %592 = vmatmul.mubr.f32.gmra.mrb[0].mxu0 %v526
    %v593 = vpop.f32.mrb[0].mxu0
    %v594 = vadd.f32 %v447, %v593
    %v595 = vpop.f32.mrb[0].mxu0
    %596 = vdwg.mxu0
    %v597 = vtanh.pop %v594
    %v598 = vsub.f32 %v597, %v444
    %v599 = vmul.f32 %v524, %v598
    %v600 = vadd.f32 %v444, %v599
    %s601 = scalar_lea.vmem [#allocation2], 24
    %v602 = vld [vmem:[%s601] sm:$0xff]
    %v603 = vld [vmem:[%s601 + $0x8] sm:$0xff]
    %v604 = vld [vmem:[%s601 + $0x10] sm:$0xff]
    %605 = vmatprep.subr.mxu0 %v397
    %606 = vmatpush1.msra.mxu0 %v396
    %607 = vmatprep.subr.mxu0 %v399
    %608 = vmatpush1.msra.mxu0 %v398
    %609 = vmatprep.subr.mxu0 %v401
    %610 = vmatpush1.msra.mxu0 %v400
    %611 = vmatprep.subr.mxu0 %v403
    %612 = vmatpush1.msra.mxu0 %v402
    %613 = vmatprep.subr.mxu0 %v405
    %614 = vmatpush1.msra.mxu0 %v404
    %615 = vmatprep.subr.mxu0 %v407
    %616 = vmatpush1.msra.mxu0 %v406
    %617 = vmatprep.subr.mxu0 %v409
    %618 = vmatpush1.msra.mxu0 %v408
    %619 = vmatprep.subr.mxu0 %v411
    %620 = vmatpush1.msra.mxu0 %v410
    %621 = vmatprep.subr.mxu0 %v413
    %622 = vmatpush1.msra.mxu0 %v412
    %623 = vmatprep.subr.mxu0 %v415
    %624 = vmatpush1.msra.mxu0 %v414
    %625 = vmatprep.subr.mxu0 %v417
    %626 = vmatpush1.msra.mxu0 %v416
    %627 = vmatprep.subr.mxu0 %v419
    %628 = vmatpush1.msra.mxu0 %v418
    %629 = vmatprep.subr.mxu0 %v421
    %630 = vmatpush1.msra.mxu0 %v420
    %631 = vmatprep.subr.mxu0 %v423
    %632 = vmatpush1.msra.mxu0 %v422
    %633 = vmatprep.subr.mxu0 %v425
    %634 = vmatpush1.msra.mxu0 %v424
    %635 = vmatprep.subr.mxu0 %v427
    %636 = vmatpush1.msra.mxu0 %v426
    %637 = vmatprep.subr.mxu0 0.0
    %638 = vmatpush1.msra.mxu0 0.0
    %639 = vmatprep.subr.mxu0 0.0
    %640 = vmatpush1.msra.mxu0 0.0
    %641 = vmatprep.subr.mxu0 0.0
    %642 = vmatpush1.msra.mxu0 0.0
    %643 = vmatprep.subr.mxu0 0.0
    %644 = vmatpush1.msra.mxu0 0.0
    %645 = vmatprep.subr.mxu0 0.0
    %646 = vmatpush1.msra.mxu0 0.0
    %647 = vmatprep.subr.mxu0 0.0
    %648 = vmatpush1.msra.mxu0 0.0
    %649 = vmatprep.subr.mxu0 0.0
    %650 = vmatpush1.msra.mxu0 0.0
    %651 = vmatprep.subr.mxu0 0.0
    %652 = vmatpush1.msra.mxu0 0.0
    %653 = vmatprep.subr.mxu0 0.0
    %654 = vmatpush1.msra.mxu0 0.0
    %655 = vmatprep.subr.mxu0 0.0
    %656 = vmatpush1.msra.mxu0 0.0
    %657 = vmatprep.subr.mxu0 0.0
    %658 = vmatpush1.msra.mxu0 0.0
    %659 = vmatprep.subr.mxu0 0.0
    %660 = vmatpush1.msra.mxu0 0.0
    %661 = vmatprep.subr.mxu0 0.0
    %662 = vmatpush1.msra.mxu0 0.0
    %663 = vmatprep.subr.mxu0 0.0
    %664 = vmatpush1.msra.mxu0 0.0
    %665 = vmatprep.subr.mxu0 0.0
    %666 = vmatpush1.msra.mxu0 0.0
    %667 = vmatprep.subr.mxu0 0.0
    %668 = vmatpush1.msra.mxu0 0.0
    %669 = vmatprep.mubr.f32.mxu0 0.0
    %670 = vmatmul.mubr.f32.gmra.mrb[0].mxu0 %v600
    %v671 = vpop.f32.mrb[0].mxu0
    %v672 = vadd.f32 %v602, %v671
    %v673 = vpop.f32.mrb[0].mxu0
    %v674 = vadd.f32 %v603, %v673
    %675 = vdwg.mxu0
    %v676 = vxor.u32 %v672, 2147483648
    %v677 = vmul.f32 %v676, 1.442695
    %v678 = vpow.pop %v677
    %v679 = vadd.f32 %v678, 1.0
    %v680 = vrcp.pop %v679
    %v681 = vmul.f32 1.0, %v680
    %v682 = vtanh.pop %v674
    %v683 = vmul.f32 %v682, %v600
    %684 = vmatprep.subr.mxu0 0.0
    %685 = vmatpush1.msra.mxu0 %v428
    %686 = vmatprep.subr.mxu0 0.0
    %687 = vmatpush1.msra.mxu0 %v429
    %688 = vmatprep.subr.mxu0 0.0
    %689 = vmatpush1.msra.mxu0 %v430
    %690 = vmatprep.subr.mxu0 0.0
    %691 = vmatpush1.msra.mxu0 %v431
    %692 = vmatprep.subr.mxu0 0.0
    %693 = vmatpush1.msra.mxu0 %v432
    %694 = vmatprep.subr.mxu0 0.0
    %695 = vmatpush1.msra.mxu0 %v433
    %696 = vmatprep.subr.mxu0 0.0
    %697 = vmatpush1.msra.mxu0 %v434
    %698 = vmatprep.subr.mxu0 0.0
    %699 = vmatpush1.msra.mxu0 %v435
    %700 = vmatprep.subr.mxu0 0.0
    %701 = vmatpush1.msra.mxu0 %v436
    %702 = vmatprep.subr.mxu0 0.0
    %703 = vmatpush1.msra.mxu0 %v437
    %704 = vmatprep.subr.mxu0 0.0
    %705 = vmatpush1.msra.mxu0 %v438
    %706 = vmatprep.subr.mxu0 0.0
    %707 = vmatpush1.msra.mxu0 %v439
    %708 = vmatprep.subr.mxu0 0.0
    %709 = vmatpush1.msra.mxu0 %v440
    %710 = vmatprep.subr.mxu0 0.0
    %711 = vmatpush1.msra.mxu0 %v441
    %712 = vmatprep.subr.mxu0 0.0
    %713 = vmatpush1.msra.mxu0 %v442
    %714 = vmatprep.subr.mxu0 0.0
    %715 = vmatpush1.msra.mxu0 %v443
    %716 = vmatprep.subr.mxu0 0.0
    %717 = vmatpush1.msra.mxu0 0.0
    %718 = vmatprep.subr.mxu0 0.0
    %719 = vmatpush1.msra.mxu0 0.0
    %720 = vmatprep.subr.mxu0 0.0
    %721 = vmatpush1.msra.mxu0 0.0
    %722 = vmatprep.subr.mxu0 0.0
    %723 = vmatpush1.msra.mxu0 0.0
    %724 = vmatprep.subr.mxu0 0.0
    %725 = vmatpush1.msra.mxu0 0.0
    %726 = vmatprep.subr.mxu0 0.0
    %727 = vmatpush1.msra.mxu0 0.0
    %728 = vmatprep.subr.mxu0 0.0
    %729 = vmatpush1.msra.mxu0 0.0
    %730 = vmatprep.subr.mxu0 0.0
    %731 = vmatpush1.msra.mxu0 0.0
    %732 = vmatprep.subr.mxu0 0.0
    %733 = vmatpush1.msra.mxu0 0.0
    %734 = vmatprep.subr.mxu0 0.0
    %735 = vmatpush1.msra.mxu0 0.0
    %736 = vmatprep.subr.mxu0 0.0
    %737 = vmatpush1.msra.mxu0 0.0
    %738 = vmatprep.subr.mxu0 0.0
    %739 = vmatpush1.msra.mxu0 0.0
    %740 = vmatprep.subr.mxu0 0.0
    %741 = vmatpush1.msra.mxu0 0.0
    %742 = vmatprep.subr.mxu0 0.0
    %743 = vmatpush1.msra.mxu0 0.0
    %744 = vmatprep.subr.mxu0 0.0
    %745 = vmatpush1.msra.mxu0 0.0
    %746 = vmatprep.subr.mxu0 0.0
    %747 = vmatpush1.msra.mxu0 0.0
    %748 = vmatprep.mubr.f32.mxu0 0.0
    %749 = vmatmul.mubr.f32.gmra.mrb[0].mxu0 %v683
    %v750 = vpop.f32.mrb[0].mxu0
    %v751 = vadd.f32 %v604, %v750
    %v752 = vpop.f32.mrb[0].mxu0
    %753 = vdwg.mxu0
    %v754 = vtanh.pop %v751
    %v755 = vsub.f32 %v754, %v600
    %v756 = vmul.f32 %v681, %v755
    %v757 = vadd.f32 %v600, %v756
    %s758 = scalar_lea.vmem [#allocation2], 48
    %v759 = vld [vmem:[%s758] sm:$0xff]
    %v760 = vld [vmem:[%s758 + $0x8] sm:$0xff]
    %v761 = vld [vmem:[%s758 + $0x10] sm:$0xff]
    %762 = vmatprep.subr.mxu0 %v397
    %763 = vmatpush1.msra.mxu0 %v396
    %764 = vmatprep.subr.mxu0 %v399
    %765 = vmatpush1.msra.mxu0 %v398
    %766 = vmatprep.subr.mxu0 %v401
    %767 = vmatpush1.msra.mxu0 %v400
    %768 = vmatprep.subr.mxu0 %v403
    %769 = vmatpush1.msra.mxu0 %v402
    %770 = vmatprep.subr.mxu0 %v405
    %771 = vmatpush1.msra.mxu0 %v404
    %772 = vmatprep.subr.mxu0 %v407
    %773 = vmatpush1.msra.mxu0 %v406
    %774 = vmatprep.subr.mxu0 %v409
    %775 = vmatpush1.msra.mxu0 %v408
    %776 = vmatprep.subr.mxu0 %v411
    %777 = vmatpush1.msra.mxu0 %v410
    %778 = vmatprep.subr.mxu0 %v413
    %779 = vmatpush1.msra.mxu0 %v412
    %780 = vmatprep.subr.mxu0 %v415
    %781 = vmatpush1.msra.mxu0 %v414
    %782 = vmatprep.subr.mxu0 %v417
    %783 = vmatpush1.msra.mxu0 %v416
    %784 = vmatprep.subr.mxu0 %v419
    %785 = vmatpush1.msra.mxu0 %v418
    %786 = vmatprep.subr.mxu0 %v421
    %787 = vmatpush1.msra.mxu0 %v420
    %788 = vmatprep.subr.mxu0 %v423
    %789 = vmatpush1.msra.mxu0 %v422
    %790 = vmatprep.subr.mxu0 %v425
    %791 = vmatpush1.msra.mxu0 %v424
    %792 = vmatprep.subr.mxu0 %v427
    %793 = vmatpush1.msra.mxu0 %v426
    %794 = vmatprep.subr.mxu0 0.0
    %795 = vmatpush1.msra.mxu0 0.0
    %796 = vmatprep.subr.mxu0 0.0
    %797 = vmatpush1.msra.mxu0 0.0
    %798 = vmatprep.subr.mxu0 0.0
    %799 = vmatpush1.msra.mxu0 0.0
    %800 = vmatprep.subr.mxu0 0.0
    %801 = vmatpush1.msra.mxu0 0.0
    %802 = vmatprep.subr.mxu0 0.0
    %803 = vmatpush1.msra.mxu0 0.0
    %804 = vmatprep.subr.mxu0 0.0
    %805 = vmatpush1.msra.mxu0 0.0
    %806 = vmatprep.subr.mxu0 0.0
    %807 = vmatpush1.msra.mxu0 0.0
    %808 = vmatprep.subr.mxu0 0.0
    %809 = vmatpush1.msra.mxu0 0.0
    %810 = vmatprep.subr.mxu0 0.0
    %811 = vmatpush1.msra.mxu0 0.0
    %812 = vmatprep.subr.mxu0 0.0
    %813 = vmatpush1.msra.mxu0 0.0
    %814 = vmatprep.subr.mxu0 0.0
    %815 = vmatpush1.msra.mxu0 0.0
    %816 = vmatprep.subr.mxu0 0.0
    %817 = vmatpush1.msra.mxu0 0.0
    %818 = vmatprep.subr.mxu0 0.0
    %819 = vmatpush1.msra.mxu0 0.0
    %820 = vmatprep.subr.mxu0 0.0
    %821 = vmatpush1.msra.mxu0 0.0
    %822 = vmatprep.subr.mxu0 0.0
    %823 = vmatpush1.msra.mxu0 0.0
    %824 = vmatprep.subr.mxu0 0.0
    %825 = vmatpush1.msra.mxu0 0.0
    %826 = vmatprep.mubr.f32.mxu0 0.0
    %827 = vmatmul.mubr.f32.gmra.mrb[0].mxu0 %v757
    %v828 = vpop.f32.mrb[0].mxu0
    %v829 = vadd.f32 %v759, %v828
    %v830 = vpop.f32.mrb[0].mxu0
    %v831 = vadd.f32 %v760, %v830
    %832 = vdwg.mxu0
    %v833 = vxor.u32 %v829, 2147483648
    %v834 = vmul.f32 %v833, 1.442695
    %v835 = vpow.pop %v834
    %v836 = vadd.f32 %v835, 1.0
    %v837 = vrcp.pop %v836
    %v838 = vmul.f32 1.0, %v837
    %v839 = vtanh.pop %v831
    %v840 = vmul.f32 %v839, %v757
    %841 = vmatprep.subr.mxu0 0.0
    %842 = vmatpush1.msra.mxu0 %v428
    %843 = vmatprep.subr.mxu0 0.0
    %844 = vmatpush1.msra.mxu0 %v429
    %845 = vmatprep.subr.mxu0 0.0
    %846 = vmatpush1.msra.mxu0 %v430
    %847 = vmatprep.subr.mxu0 0.0
    %848 = vmatpush1.msra.mxu0 %v431
    %849 = vmatprep.subr.mxu0 0.0
    %850 = vmatpush1.msra.mxu0 %v432
    %851 = vmatprep.subr.mxu0 0.0
    %852 = vmatpush1.msra.mxu0 %v433
    %853 = vmatprep.subr.mxu0 0.0
    %854 = vmatpush1.msra.mxu0 %v434
    %855 = vmatprep.subr.mxu0 0.0
    %856 = vmatpush1.msra.mxu0 %v435
    %857 = vmatprep.subr.mxu0 0.0
    %858 = vmatpush1.msra.mxu0 %v436
    %859 = vmatprep.subr.mxu0 0.0
    %860 = vmatpush1.msra.mxu0 %v437
    %861 = vmatprep.subr.mxu0 0.0
    %862 = vmatpush1.msra.mxu0 %v438
    %863 = vmatprep.subr.mxu0 0.0
    %864 = vmatpush1.msra.mxu0 %v439
    %865 = vmatprep.subr.mxu0 0.0
    %866 = vmatpush1.msra.mxu0 %v440
    %867 = vmatprep.subr.mxu0 0.0
    %868 = vmatpush1.msra.mxu0 %v441
    %869 = vmatprep.subr.mxu0 0.0
    %870 = vmatpush1.msra.mxu0 %v442
    %871 = vmatprep.subr.mxu0 0.0
    %872 = vmatpush1.msra.mxu0 %v443
    %873 = vmatprep.subr.mxu0 0.0
    %874 = vmatpush1.msra.mxu0 0.0
    %875 = vmatprep.subr.mxu0 0.0
    %876 = vmatpush1.msra.mxu0 0.0
    %877 = vmatprep.subr.mxu0 0.0
    %878 = vmatpush1.msra.mxu0 0.0
    %879 = vmatprep.subr.mxu0 0.0
    %880 = vmatpush1.msra.mxu0 0.0
    %881 = vmatprep.subr.mxu0 0.0
    %882 = vmatpush1.msra.mxu0 0.0
    %883 = vmatprep.subr.mxu0 0.0
    %884 = vmatpush1.msra.mxu0 0.0
    %885 = vmatprep.subr.mxu0 0.0
    %886 = vmatpush1.msra.mxu0 0.0
    %887 = vmatprep.subr.mxu0 0.0
    %888 = vmatpush1.msra.mxu0 0.0
    %889 = vmatprep.subr.mxu0 0.0
    %890 = vmatpush1.msra.mxu0 0.0
    %891 = vmatprep.subr.mxu0 0.0
    %892 = vmatpush1.msra.mxu0 0.0
    %893 = vmatprep.subr.mxu0 0.0
    %894 = vmatpush1.msra.mxu0 0.0
    %895 = vmatprep.subr.mxu0 0.0
    %896 = vmatpush1.msra.mxu0 0.0
    %897 = vmatprep.subr.mxu0 0.0
    %898 = vmatpush1.msra.mxu0 0.0
    %899 = vmatprep.subr.mxu0 0.0
    %900 = vmatpush1.msra.mxu0 0.0
    %901 = vmatprep.subr.mxu0 0.0
    %902 = vmatpush1.msra.mxu0 0.0
    %903 = vmatprep.subr.mxu0 0.0
    %904 = vmatpush1.msra.mxu0 0.0
    %905 = vmatprep.mubr.f32.mxu0 0.0
    %906 = vmatmul.mubr.f32.gmra.mrb[0].mxu0 %v840
    %v907 = vpop.f32.mrb[0].mxu0
    %v908 = vadd.f32 %v761, %v907
    %v909 = vpop.f32.mrb[0].mxu0
    %910 = vdwg.mxu0
    %v911 = vtanh.pop %v908
    %v912 = vsub.f32 %v911, %v757
    %v913 = vmul.f32 %v838, %v912
    %v914 = vadd.f32 %v757, %v913
    %s915 = scalar_lea.vmem [#allocation2], 72
    %v916 = vld [vmem:[%s915] sm:$0xff]
    %v917 = vld [vmem:[%s915 + $0x8] sm:$0xff]
    %v918 = vld [vmem:[%s915 + $0x10] sm:$0xff]
    %919 = vmatprep.subr.mxu0 %v397
    %920 = vmatpush1.msra.mxu0 %v396
    %921 = vmatprep.subr.mxu0 %v399
    %922 = vmatpush1.msra.mxu0 %v398
    %923 = vmatprep.subr.mxu0 %v401
    %924 = vmatpush1.msra.mxu0 %v400
    %925 = vmatprep.subr.mxu0 %v403
    %926 = vmatpush1.msra.mxu0 %v402
    %927 = vmatprep.subr.mxu0 %v405
    %928 = vmatpush1.msra.mxu0 %v404
    %929 = vmatprep.subr.mxu0 %v407
    %930 = vmatpush1.msra.mxu0 %v406
    %931 = vmatprep.subr.mxu0 %v409
    %932 = vmatpush1.msra.mxu0 %v408
    %933 = vmatprep.subr.mxu0 %v411
    %934 = vmatpush1.msra.mxu0 %v410
    %935 = vmatprep.subr.mxu0 %v413
    %936 = vmatpush1.msra.mxu0 %v412
    %937 = vmatprep.subr.mxu0 %v415
    %938 = vmatpush1.msra.mxu0 %v414
    %939 = vmatprep.subr.mxu0 %v417
    %940 = vmatpush1.msra.mxu0 %v416
    %941 = vmatprep.subr.mxu0 %v419
    %942 = vmatpush1.msra.mxu0 %v418
    %943 = vmatprep.subr.mxu0 %v421
    %944 = vmatpush1.msra.mxu0 %v420
    %945 = vmatprep.subr.mxu0 %v423
    %946 = vmatpush1.msra.mxu0 %v422
    %947 = vmatprep.subr.mxu0 %v425
    %948 = vmatpush1.msra.mxu0 %v424
    %949 = vmatprep.subr.mxu0 %v427
    %950 = vmatpush1.msra.mxu0 %v426
    %951 = vmatprep.subr.mxu0 0.0
    %952 = vmatpush1.msra.mxu0 0.0
    %953 = vmatprep.subr.mxu0 0.0
    %954 = vmatpush1.msra.mxu0 0.0
    %955 = vmatprep.subr.mxu0 0.0
    %956 = vmatpush1.msra.mxu0 0.0
    %957 = vmatprep.subr.mxu0 0.0
    %958 = vmatpush1.msra.mxu0 0.0
    %959 = vmatprep.subr.mxu0 0.0
    %960 = vmatpush1.msra.mxu0 0.0
    %961 = vmatprep.subr.mxu0 0.0
    %962 = vmatpush1.msra.mxu0 0.0
    %963 = vmatprep.subr.mxu0 0.0
    %964 = vmatpush1.msra.mxu0 0.0
    %965 = vmatprep.subr.mxu0 0.0
    %966 = vmatpush1.msra.mxu0 0.0
    %967 = vmatprep.subr.mxu0 0.0
    %968 = vmatpush1.msra.mxu0 0.0
    %969 = vmatprep.subr.mxu0 0.0
    %970 = vmatpush1.msra.mxu0 0.0
    %971 = vmatprep.subr.mxu0 0.0
    %972 = vmatpush1.msra.mxu0 0.0
    %973 = vmatprep.subr.mxu0 0.0
    %974 = vmatpush1.msra.mxu0 0.0
    %975 = vmatprep.subr.mxu0 0.0
    %976 = vmatpush1.msra.mxu0 0.0
    %977 = vmatprep.subr.mxu0 0.0
    %978 = vmatpush1.msra.mxu0 0.0
    %979 = vmatprep.subr.mxu0 0.0
    %980 = vmatpush1.msra.mxu0 0.0
    %981 = vmatprep.subr.mxu0 0.0
    %982 = vmatpush1.msra.mxu0 0.0
    %983 = vmatprep.mubr.f32.mxu0 0.0
    %984 = vmatmul.mubr.f32.gmra.mrb[0].mxu0 %v914
    %v985 = vpop.f32.mrb[0].mxu0
    %v986 = vadd.f32 %v916, %v985
    %v987 = vpop.f32.mrb[0].mxu0
    %v988 = vadd.f32 %v917, %v987
    %989 = vdwg.mxu0
    %v990 = vxor.u32 %v986, 2147483648
    %v991 = vmul.f32 %v990, 1.442695
    %v992 = vpow.pop %v991
    %v993 = vadd.f32 %v992, 1.0
    %v994 = vrcp.pop %v993
    %v995 = vmul.f32 1.0, %v994
    %v996 = vtanh.pop %v988
    %v997 = vmul.f32 %v996, %v914
    %998 = vmatprep.subr.mxu0 0.0
    %999 = vmatpush1.msra.mxu0 %v428
    %1000 = vmatprep.subr.mxu0 0.0
    %1001 = vmatpush1.msra.mxu0 %v429
    %1002 = vmatprep.subr.mxu0 0.0
    %1003 = vmatpush1.msra.mxu0 %v430
    %1004 = vmatprep.subr.mxu0 0.0
    %1005 = vmatpush1.msra.mxu0 %v431
    %1006 = vmatprep.subr.mxu0 0.0
    %1007 = vmatpush1.msra.mxu0 %v432
    %1008 = vmatprep.subr.mxu0 0.0
    %1009 = vmatpush1.msra.mxu0 %v433
    %1010 = vmatprep.subr.mxu0 0.0
    %1011 = vmatpush1.msra.mxu0 %v434
    %1012 = vmatprep.subr.mxu0 0.0
    %1013 = vmatpush1.msra.mxu0 %v435
    %1014 = vmatprep.subr.mxu0 0.0
    %1015 = vmatpush1.msra.mxu0 %v436
    %1016 = vmatprep.subr.mxu0 0.0
    %1017 = vmatpush1.msra.mxu0 %v437
    %1018 = vmatprep.subr.mxu0 0.0
    %1019 = vmatpush1.msra.mxu0 %v438
    %1020 = vmatprep.subr.mxu0 0.0
    %1021 = vmatpush1.msra.mxu0 %v439
    %1022 = vmatprep.subr.mxu0 0.0
    %1023 = vmatpush1.msra.mxu0 %v440
    %1024 = vmatprep.subr.mxu0 0.0
    %1025 = vmatpush1.msra.mxu0 %v441
    %1026 = vmatprep.subr.mxu0 0.0
    %1027 = vmatpush1.msra.mxu0 %v442
    %1028 = vmatprep.subr.mxu0 0.0
    %1029 = vmatpush1.msra.mxu0 %v443
    %1030 = vmatprep.subr.mxu0 0.0
    %1031 = vmatpush1.msra.mxu0 0.0
    %1032 = vmatprep.subr.mxu0 0.0
    %1033 = vmatpush1.msra.mxu0 0.0
    %1034 = vmatprep.subr.mxu0 0.0
    %1035 = vmatpush1.msra.mxu0 0.0
    %1036 = vmatprep.subr.mxu0 0.0
    %1037 = vmatpush1.msra.mxu0 0.0
    %1038 = vmatprep.subr.mxu0 0.0
    %1039 = vmatpush1.msra.mxu0 0.0
    %1040 = vmatprep.subr.mxu0 0.0
    %1041 = vmatpush1.msra.mxu0 0.0
    %1042 = vmatprep.subr.mxu0 0.0
    %1043 = vmatpush1.msra.mxu0 0.0
    %1044 = vmatprep.subr.mxu0 0.0
    %1045 = vmatpush1.msra.mxu0 0.0
    %1046 = vmatprep.subr.mxu0 0.0
    %1047 = vmatpush1.msra.mxu0 0.0
    %1048 = vmatprep.subr.mxu0 0.0
    %1049 = vmatpush1.msra.mxu0 0.0
    %1050 = vmatprep.subr.mxu0 0.0
    %1051 = vmatpush1.msra.mxu0 0.0
    %1052 = vmatprep.subr.mxu0 0.0
    %1053 = vmatpush1.msra.mxu0 0.0
    %1054 = vmatprep.subr.mxu0 0.0
    %1055 = vmatpush1.msra.mxu0 0.0
    %1056 = vmatprep.subr.mxu0 0.0
    %1057 = vmatpush1.msra.mxu0 0.0
    %1058 = vmatprep.subr.mxu0 0.0
    %1059 = vmatpush1.msra.mxu0 0.0
    %1060 = vmatprep.subr.mxu0 0.0
    %1061 = vmatpush1.msra.mxu0 0.0
    %1062 = vmatprep.mubr.f32.mxu0 0.0
    %1063 = vmatmul.mubr.f32.gmra.mrb[0].mxu0 %v997
    %v1064 = vpop.f32.mrb[0].mxu0
    %v1065 = vadd.f32 %v918, %v1064
    %v1066 = vpop.f32.mrb[0].mxu0
    %1067 = vdwg.mxu0
    %v1068 = vtanh.pop %v1065
    %v1069 = vsub.f32 %v1068, %v914
    %v1070 = vmul.f32 %v995, %v1069
    %v1071 = vadd.f32 %v914, %v1070
    %s1072 = scalar_lea.vmem [#allocation2], 96
    %v1073 = vld [vmem:[%s1072] sm:$0xff]
    %v1074 = vld [vmem:[%s1072 + $0x8] sm:$0xff]
    %v1075 = vld [vmem:[%s1072 + $0x10] sm:$0xff]
    %1076 = vmatprep.subr.mxu0 %v397
    %1077 = vmatpush1.msra.mxu0 %v396
    %1078 = vmatprep.subr.mxu0 %v399
    %1079 = vmatpush1.msra.mxu0 %v398
    %1080 = vmatprep.subr.mxu0 %v401
    %1081 = vmatpush1.msra.mxu0 %v400
    %1082 = vmatprep.subr.mxu0 %v403
    %1083 = vmatpush1.msra.mxu0 %v402
    %1084 = vmatprep.subr.mxu0 %v405
    %1085 = vmatpush1.msra.mxu0 %v404
    %1086 = vmatprep.subr.mxu0 %v407
    %1087 = vmatpush1.msra.mxu0 %v406
    %1088 = vmatprep.subr.mxu0 %v409
    %1089 = vmatpush1.msra.mxu0 %v408
    %1090 = vmatprep.subr.mxu0 %v411
    %1091 = vmatpush1.msra.mxu0 %v410
    %1092 = vmatprep.subr.mxu0 %v413
    %1093 = vmatpush1.msra.mxu0 %v412
    %1094 = vmatprep.subr.mxu0 %v415
    %1095 = vmatpush1.msra.mxu0 %v414
    %1096 = vmatprep.subr.mxu0 %v417
    %1097 = vmatpush1.msra.mxu0 %v416
    %1098 = vmatprep.subr.mxu0 %v419
    %1099 = vmatpush1.msra.mxu0 %v418
    %1100 = vmatprep.subr.mxu0 %v421
    %1101 = vmatpush1.msra.mxu0 %v420
    %1102 = vmatprep.subr.mxu0 %v423
    %1103 = vmatpush1.msra.mxu0 %v422
    %1104 = vmatprep.subr.mxu0 %v425
    %1105 = vmatpush1.msra.mxu0 %v424
    %1106 = vmatprep.subr.mxu0 %v427
    %1107 = vmatpush1.msra.mxu0 %v426
    %1108 = vmatprep.subr.mxu0 0.0
    %1109 = vmatpush1.msra.mxu0 0.0
    %1110 = vmatprep.subr.mxu0 0.0
    %1111 = vmatpush1.msra.mxu0 0.0
    %1112 = vmatprep.subr.mxu0 0.0
    %1113 = vmatpush1.msra.mxu0 0.0
    %1114 = vmatprep.subr.mxu0 0.0
    %1115 = vmatpush1.msra.mxu0 0.0
    %1116 = vmatprep.subr.mxu0 0.0
    %1117 = vmatpush1.msra.mxu0 0.0
    %1118 = vmatprep.subr.mxu0 0.0
    %1119 = vmatpush1.msra.mxu0 0.0
    %1120 = vmatprep.subr.mxu0 0.0
    %1121 = vmatpush1.msra.mxu0 0.0
    %1122 = vmatprep.subr.mxu0 0.0
    %1123 = vmatpush1.msra.mxu0 0.0
    %1124 = vmatprep.subr.mxu0 0.0
    %1125 = vmatpush1.msra.mxu0 0.0
    %1126 = vmatprep.subr.mxu0 0.0
    %1127 = vmatpush1.msra.mxu0 0.0
    %1128 = vmatprep.subr.mxu0 0.0
    %1129 = vmatpush1.msra.mxu0 0.0
    %1130 = vmatprep.subr.mxu0 0.0
    %1131 = vmatpush1.msra.mxu0 0.0
    %1132 = vmatprep.subr.mxu0 0.0
    %1133 = vmatpush1.msra.mxu0 0.0
    %1134 = vmatprep.subr.mxu0 0.0
    %1135 = vmatpush1.msra.mxu0 0.0
    %1136 = vmatprep.subr.mxu0 0.0
    %1137 = vmatpush1.msra.mxu0 0.0
    %1138 = vmatprep.subr.mxu0 0.0
    %1139 = vmatpush1.msra.mxu0 0.0
    %1140 = vmatprep.mubr.f32.mxu0 0.0
    %1141 = vmatmul.mubr.f32.gmra.mrb[0].mxu0 %v1071
    %v1142 = vpop.f32.mrb[0].mxu0
    %v1143 = vadd.f32 %v1073, %v1142
    %v1144 = vpop.f32.mrb[0].mxu0
    %v1145 = vadd.f32 %v1074, %v1144
    %1146 = vdwg.mxu0
    %v1147 = vxor.u32 %v1143, 2147483648
    %v1148 = vmul.f32 %v1147, 1.442695
    %v1149 = vpow.pop %v1148
    %v1150 = vadd.f32 %v1149, 1.0
    %v1151 = vrcp.pop %v1150
    %v1152 = vmul.f32 1.0, %v1151
    %v1153 = vtanh.pop %v1145
    %v1154 = vmul.f32 %v1153, %v1071
    %1155 = vmatprep.subr.mxu0 0.0
    %1156 = vmatpush1.msra.mxu0 %v428
    %1157 = vmatprep.subr.mxu0 0.0
    %1158 = vmatpush1.msra.mxu0 %v429
    %1159 = vmatprep.subr.mxu0 0.0
    %1160 = vmatpush1.msra.mxu0 %v430
    %1161 = vmatprep.subr.mxu0 0.0
    %1162 = vmatpush1.msra.mxu0 %v431
    %1163 = vmatprep.subr.mxu0 0.0
    %1164 = vmatpush1.msra.mxu0 %v432
    %1165 = vmatprep.subr.mxu0 0.0
    %1166 = vmatpush1.msra.mxu0 %v433
    %1167 = vmatprep.subr.mxu0 0.0
    %1168 = vmatpush1.msra.mxu0 %v434
    %1169 = vmatprep.subr.mxu0 0.0
    %1170 = vmatpush1.msra.mxu0 %v435
    %1171 = vmatprep.subr.mxu0 0.0
    %1172 = vmatpush1.msra.mxu0 %v436
    %1173 = vmatprep.subr.mxu0 0.0
    %1174 = vmatpush1.msra.mxu0 %v437
    %1175 = vmatprep.subr.mxu0 0.0
    %1176 = vmatpush1.msra.mxu0 %v438
    %1177 = vmatprep.subr.mxu0 0.0
    %1178 = vmatpush1.msra.mxu0 %v439
    %1179 = vmatprep.subr.mxu0 0.0
    %1180 = vmatpush1.msra.mxu0 %v440
    %1181 = vmatprep.subr.mxu0 0.0
    %1182 = vmatpush1.msra.mxu0 %v441
    %1183 = vmatprep.subr.mxu0 0.0
    %1184 = vmatpush1.msra.mxu0 %v442
    %1185 = vmatprep.subr.mxu0 0.0
    %1186 = vmatpush1.msra.mxu0 %v443
    %1187 = vmatprep.subr.mxu0 0.0
    %1188 = vmatpush1.msra.mxu0 0.0
    %1189 = vmatprep.subr.mxu0 0.0
    %1190 = vmatpush1.msra.mxu0 0.0
    %1191 = vmatprep.subr.mxu0 0.0
    %1192 = vmatpush1.msra.mxu0 0.0
    %1193 = vmatprep.subr.mxu0 0.0
    %1194 = vmatpush1.msra.mxu0 0.0
    %1195 = vmatprep.subr.mxu0 0.0
    %1196 = vmatpush1.msra.mxu0 0.0
    %1197 = vmatprep.subr.mxu0 0.0
    %1198 = vmatpush1.msra.mxu0 0.0
    %1199 = vmatprep.subr.mxu0 0.0
    %1200 = vmatpush1.msra.mxu0 0.0
    %1201 = vmatprep.subr.mxu0 0.0
    %1202 = vmatpush1.msra.mxu0 0.0
    %1203 = vmatprep.subr.mxu0 0.0
    %1204 = vmatpush1.msra.mxu0 0.0
    %1205 = vmatprep.subr.mxu0 0.0
    %1206 = vmatpush1.msra.mxu0 0.0
    %1207 = vmatprep.subr.mxu0 0.0
    %1208 = vmatpush1.msra.mxu0 0.0
    %1209 = vmatprep.subr.mxu0 0.0
    %1210 = vmatpush1.msra.mxu0 0.0
    %1211 = vmatprep.subr.mxu0 0.0
    %1212 = vmatpush1.msra.mxu0 0.0
    %1213 = vmatprep.subr.mxu0 0.0
    %1214 = vmatpush1.msra.mxu0 0.0
    %1215 = vmatprep.subr.mxu0 0.0
    %1216 = vmatpush1.msra.mxu0 0.0
    %1217 = vmatprep.subr.mxu0 0.0
    %1218 = vmatpush1.msra.mxu0 0.0
    %1219 = vmatprep.mubr.f32.mxu0 0.0
    %1220 = vmatmul.mubr.f32.gmra.mrb[0].mxu0 %v1154
    %v1221 = vpop.f32.mrb[0].mxu0
    %v1222 = vadd.f32 %v1075, %v1221
    %v1223 = vpop.f32.mrb[0].mxu0
    %1224 = vdwg.mxu0
    %v1225 = vtanh.pop %v1222
    %v1226 = vsub.f32 %v1225, %v1071
    %v1227 = vmul.f32 %v1152, %v1226
    %v1228 = vadd.f32 %v1071, %v1227
    %s1229 = scalar_lea.vmem [#allocation2], 120
    %v1230 = vld [vmem:[%s1229] sm:$0xff]
    %v1231 = vld [vmem:[%s1229 + $0x8] sm:$0xff]
    %v1232 = vld [vmem:[%s1229 + $0x10] sm:$0xff]
    %1233 = vmatprep.subr.mxu0 %v397
    %1234 = vmatpush1.msra.mxu0 %v396
    %1235 = vmatprep.subr.mxu0 %v399
    %1236 = vmatpush1.msra.mxu0 %v398
    %1237 = vmatprep.subr.mxu0 %v401
    %1238 = vmatpush1.msra.mxu0 %v400
    %1239 = vmatprep.subr.mxu0 %v403
    %1240 = vmatpush1.msra.mxu0 %v402
    %1241 = vmatprep.subr.mxu0 %v405
    %1242 = vmatpush1.msra.mxu0 %v404
    %1243 = vmatprep.subr.mxu0 %v407
    %1244 = vmatpush1.msra.mxu0 %v406
    %1245 = vmatprep.subr.mxu0 %v409
    %1246 = vmatpush1.msra.mxu0 %v408
    %1247 = vmatprep.subr.mxu0 %v411
    %1248 = vmatpush1.msra.mxu0 %v410
    %1249 = vmatprep.subr.mxu0 %v413
    %1250 = vmatpush1.msra.mxu0 %v412
    %1251 = vmatprep.subr.mxu0 %v415
    %1252 = vmatpush1.msra.mxu0 %v414
    %1253 = vmatprep.subr.mxu0 %v417
    %1254 = vmatpush1.msra.mxu0 %v416
    %1255 = vmatprep.subr.mxu0 %v419
    %1256 = vmatpush1.msra.mxu0 %v418
    %1257 = vmatprep.subr.mxu0 %v421
    %1258 = vmatpush1.msra.mxu0 %v420
    %1259 = vmatprep.subr.mxu0 %v423
    %1260 = vmatpush1.msra.mxu0 %v422
    %1261 = vmatprep.subr.mxu0 %v425
    %1262 = vmatpush1.msra.mxu0 %v424
    %1263 = vmatprep.subr.mxu0 %v427
    %1264 = vmatpush1.msra.mxu0 %v426
    %1265 = vmatprep.subr.mxu0 0.0
    %1266 = vmatpush1.msra.mxu0 0.0
    %1267 = vmatprep.subr.mxu0 0.0
    %1268 = vmatpush1.msra.mxu0 0.0
    %1269 = vmatprep.subr.mxu0 0.0
    %1270 = vmatpush1.msra.mxu0 0.0
    %1271 = vmatprep.subr.mxu0 0.0
    %1272 = vmatpush1.msra.mxu0 0.0
    %1273 = vmatprep.subr.mxu0 0.0
    %1274 = vmatpush1.msra.mxu0 0.0
    %1275 = vmatprep.subr.mxu0 0.0
    %1276 = vmatpush1.msra.mxu0 0.0
    %1277 = vmatprep.subr.mxu0 0.0
    %1278 = vmatpush1.msra.mxu0 0.0
    %1279 = vmatprep.subr.mxu0 0.0
    %1280 = vmatpush1.msra.mxu0 0.0
    %1281 = vmatprep.subr.mxu0 0.0
    %1282 = vmatpush1.msra.mxu0 0.0
    %1283 = vmatprep.subr.mxu0 0.0
    %1284 = vmatpush1.msra.mxu0 0.0
    %1285 = vmatprep.subr.mxu0 0.0
    %1286 = vmatpush1.msra.mxu0 0.0
    %1287 = vmatprep.subr.mxu0 0.0
    %1288 = vmatpush1.msra.mxu0 0.0
    %1289 = vmatprep.subr.mxu0 0.0
    %1290 = vmatpush1.msra.mxu0 0.0
    %1291 = vmatprep.subr.mxu0 0.0
    %1292 = vmatpush1.msra.mxu0 0.0
    %1293 = vmatprep.subr.mxu0 0.0
    %1294 = vmatpush1.msra.mxu0 0.0
    %1295 = vmatprep.subr.mxu0 0.0
    %1296 = vmatpush1.msra.mxu0 0.0
    %1297 = vmatprep.mubr.f32.mxu0 0.0
    %1298 = vmatmul.mubr.f32.gmra.mrb[0].mxu0 %v1228
    %v1299 = vpop.f32.mrb[0].mxu0
    %v1300 = vadd.f32 %v1230, %v1299
    %v1301 = vpop.f32.mrb[0].mxu0
    %v1302 = vadd.f32 %v1231, %v1301
    %1303 = vdwg.mxu0
    %v1304 = vxor.u32 %v1300, 2147483648
    %v1305 = vmul.f32 %v1304, 1.442695
    %v1306 = vpow.pop %v1305
    %v1307 = vadd.f32 %v1306, 1.0
    %v1308 = vrcp.pop %v1307
    %v1309 = vmul.f32 1.0, %v1308
    %v1310 = vtanh.pop %v1302
    %v1311 = vmul.f32 %v1310, %v1228
    %1312 = vmatprep.subr.mxu0 0.0
    %1313 = vmatpush1.msra.mxu0 %v428
    %1314 = vmatprep.subr.mxu0 0.0
    %1315 = vmatpush1.msra.mxu0 %v429
    %1316 = vmatprep.subr.mxu0 0.0
    %1317 = vmatpush1.msra.mxu0 %v430
    %1318 = vmatprep.subr.mxu0 0.0
    %1319 = vmatpush1.msra.mxu0 %v431
    %1320 = vmatprep.subr.mxu0 0.0
    %1321 = vmatpush1.msra.mxu0 %v432
    %1322 = vmatprep.subr.mxu0 0.0
    %1323 = vmatpush1.msra.mxu0 %v433
    %1324 = vmatprep.subr.mxu0 0.0
    %1325 = vmatpush1.msra.mxu0 %v434
    %1326 = vmatprep.subr.mxu0 0.0
    %1327 = vmatpush1.msra.mxu0 %v435
    %1328 = vmatprep.subr.mxu0 0.0
    %1329 = vmatpush1.msra.mxu0 %v436
    %1330 = vmatprep.subr.mxu0 0.0
    %1331 = vmatpush1.msra.mxu0 %v437
    %1332 = vmatprep.subr.mxu0 0.0
    %1333 = vmatpush1.msra.mxu0 %v438
    %1334 = vmatprep.subr.mxu0 0.0
    %1335 = vmatpush1.msra.mxu0 %v439
    %1336 = vmatprep.subr.mxu0 0.0
    %1337 = vmatpush1.msra.mxu0 %v440
    %1338 = vmatprep.subr.mxu0 0.0
    %1339 = vmatpush1.msra.mxu0 %v441
    %1340 = vmatprep.subr.mxu0 0.0
    %1341 = vmatpush1.msra.mxu0 %v442
    %1342 = vmatprep.subr.mxu0 0.0
    %1343 = vmatpush1.msra.mxu0 %v443
    %1344 = vmatprep.subr.mxu0 0.0
    %1345 = vmatpush1.msra.mxu0 0.0
    %1346 = vmatprep.subr.mxu0 0.0
    %1347 = vmatpush1.msra.mxu0 0.0
    %1348 = vmatprep.subr.mxu0 0.0
    %1349 = vmatpush1.msra.mxu0 0.0
    %1350 = vmatprep.subr.mxu0 0.0
    %1351 = vmatpush1.msra.mxu0 0.0
    %1352 = vmatprep.subr.mxu0 0.0
    %1353 = vmatpush1.msra.mxu0 0.0
    %1354 = vmatprep.subr.mxu0 0.0
    %1355 = vmatpush1.msra.mxu0 0.0
    %1356 = vmatprep.subr.mxu0 0.0
    %1357 = vmatpush1.msra.mxu0 0.0
    %1358 = vmatprep.subr.mxu0 0.0
    %1359 = vmatpush1.msra.mxu0 0.0
    %1360 = vmatprep.subr.mxu0 0.0
    %1361 = vmatpush1.msra.mxu0 0.0
    %1362 = vmatprep.subr.mxu0 0.0
    %1363 = vmatpush1.msra.mxu0 0.0
    %1364 = vmatprep.subr.mxu0 0.0
    %1365 = vmatpush1.msra.mxu0 0.0
    %1366 = vmatprep.subr.mxu0 0.0
    %1367 = vmatpush1.msra.mxu0 0.0
    %1368 = vmatprep.subr.mxu0 0.0
    %1369 = vmatpush1.msra.mxu0 0.0
    %1370 = vmatprep.subr.mxu0 0.0
    %1371 = vmatpush1.msra.mxu0 0.0
    %1372 = vmatprep.subr.mxu0 0.0
    %1373 = vmatpush1.msra.mxu0 0.0
    %1374 = vmatprep.subr.mxu0 0.0
    %1375 = vmatpush1.msra.mxu0 0.0
    %1376 = vmatprep.mubr.f32.mxu0 0.0
    %1377 = vmatmul.mubr.f32.gmra.mrb[0].mxu0 %v1311
    %v1378 = vpop.f32.mrb[0].mxu0
    %v1379 = vadd.f32 %v1232, %v1378
    %v1380 = vpop.f32.mrb[0].mxu0
    %1381 = vdwg.mxu0
    %v1382 = vtanh.pop %v1379
    %v1383 = vsub.f32 %v1382, %v1228
    %v1384 = vmul.f32 %v1309, %v1383
    %v1385 = vadd.f32 %v1228, %v1384
    %s1386 = scalar_lea.vmem [#allocation2], 144
    %v1387 = vld [vmem:[%s1386] sm:$0xff]
    %v1388 = vld [vmem:[%s1386 + $0x8] sm:$0xff]
    %v1389 = vld [vmem:[%s1386 + $0x10] sm:$0xff]
    %1390 = vmatprep.subr.mxu0 %v397
    %1391 = vmatpush1.msra.mxu0 %v396
    %1392 = vmatprep.subr.mxu0 %v399
    %1393 = vmatpush1.msra.mxu0 %v398
    %1394 = vmatprep.subr.mxu0 %v401
    %1395 = vmatpush1.msra.mxu0 %v400
    %1396 = vmatprep.subr.mxu0 %v403
    %1397 = vmatpush1.msra.mxu0 %v402
    %1398 = vmatprep.subr.mxu0 %v405
    %1399 = vmatpush1.msra.mxu0 %v404
    %1400 = vmatprep.subr.mxu0 %v407
    %1401 = vmatpush1.msra.mxu0 %v406
    %1402 = vmatprep.subr.mxu0 %v409
    %1403 = vmatpush1.msra.mxu0 %v408
    %1404 = vmatprep.subr.mxu0 %v411
    %1405 = vmatpush1.msra.mxu0 %v410
    %1406 = vmatprep.subr.mxu0 %v413
    %1407 = vmatpush1.msra.mxu0 %v412
    %1408 = vmatprep.subr.mxu0 %v415
    %1409 = vmatpush1.msra.mxu0 %v414
    %1410 = vmatprep.subr.mxu0 %v417
    %1411 = vmatpush1.msra.mxu0 %v416
    %1412 = vmatprep.subr.mxu0 %v419
    %1413 = vmatpush1.msra.mxu0 %v418
    %1414 = vmatprep.subr.mxu0 %v421
    %1415 = vmatpush1.msra.mxu0 %v420
    %1416 = vmatprep.subr.mxu0 %v423
    %1417 = vmatpush1.msra.mxu0 %v422
    %1418 = vmatprep.subr.mxu0 %v425
    %1419 = vmatpush1.msra.mxu0 %v424
    %1420 = vmatprep.subr.mxu0 %v427
    %1421 = vmatpush1.msra.mxu0 %v426
    %1422 = vmatprep.subr.mxu0 0.0
    %1423 = vmatpush1.msra.mxu0 0.0
    %1424 = vmatprep.subr.mxu0 0.0
    %1425 = vmatpush1.msra.mxu0 0.0
    %1426 = vmatprep.subr.mxu0 0.0
    %1427 = vmatpush1.msra.mxu0 0.0
    %1428 = vmatprep.subr.mxu0 0.0
    %1429 = vmatpush1.msra.mxu0 0.0
    %1430 = vmatprep.subr.mxu0 0.0
    %1431 = vmatpush1.msra.mxu0 0.0
    %1432 = vmatprep.subr.mxu0 0.0
    %1433 = vmatpush1.msra.mxu0 0.0
    %1434 = vmatprep.subr.mxu0 0.0
    %1435 = vmatpush1.msra.mxu0 0.0
    %1436 = vmatprep.subr.mxu0 0.0
    %1437 = vmatpush1.msra.mxu0 0.0
    %1438 = vmatprep.subr.mxu0 0.0
    %1439 = vmatpush1.msra.mxu0 0.0
    %1440 = vmatprep.subr.mxu0 0.0
    %1441 = vmatpush1.msra.mxu0 0.0
    %1442 = vmatprep.subr.mxu0 0.0
    %1443 = vmatpush1.msra.mxu0 0.0
    %1444 = vmatprep.subr.mxu0 0.0
    %1445 = vmatpush1.msra.mxu0 0.0
    %1446 = vmatprep.subr.mxu0 0.0
    %1447 = vmatpush1.msra.mxu0 0.0
    %1448 = vmatprep.subr.mxu0 0.0
    %1449 = vmatpush1.msra.mxu0 0.0
    %1450 = vmatprep.subr.mxu0 0.0
    %1451 = vmatpush1.msra.mxu0 0.0
    %1452 = vmatprep.subr.mxu0 0.0
    %1453 = vmatpush1.msra.mxu0 0.0
    %1454 = vmatprep.mubr.f32.mxu0 0.0
    %1455 = vmatmul.mubr.f32.gmra.mrb[0].mxu0 %v1385
    %v1456 = vpop.f32.mrb[0].mxu0
    %v1457 = vadd.f32 %v1387, %v1456
    %v1458 = vpop.f32.mrb[0].mxu0
    %v1459 = vadd.f32 %v1388, %v1458
    %1460 = vdwg.mxu0
    %v1461 = vxor.u32 %v1457, 2147483648
    %v1462 = vmul.f32 %v1461, 1.442695
    %v1463 = vpow.pop %v1462
    %v1464 = vadd.f32 %v1463, 1.0
    %v1465 = vrcp.pop %v1464
    %v1466 = vmul.f32 1.0, %v1465
    %v1467 = vtanh.pop %v1459
    %v1468 = vmul.f32 %v1467, %v1385
    %1469 = vmatprep.subr.mxu0 0.0
    %1470 = vmatpush1.msra.mxu0 %v428
    %1471 = vmatprep.subr.mxu0 0.0
    %1472 = vmatpush1.msra.mxu0 %v429
    %1473 = vmatprep.subr.mxu0 0.0
    %1474 = vmatpush1.msra.mxu0 %v430
    %1475 = vmatprep.subr.mxu0 0.0
    %1476 = vmatpush1.msra.mxu0 %v431
    %1477 = vmatprep.subr.mxu0 0.0
    %1478 = vmatpush1.msra.mxu0 %v432
    %1479 = vmatprep.subr.mxu0 0.0
    %1480 = vmatpush1.msra.mxu0 %v433
    %1481 = vmatprep.subr.mxu0 0.0
    %1482 = vmatpush1.msra.mxu0 %v434
    %1483 = vmatprep.subr.mxu0 0.0
    %1484 = vmatpush1.msra.mxu0 %v435
    %1485 = vmatprep.subr.mxu0 0.0
    %1486 = vmatpush1.msra.mxu0 %v436
    %1487 = vmatprep.subr.mxu0 0.0
    %1488 = vmatpush1.msra.mxu0 %v437
    %1489 = vmatprep.subr.mxu0 0.0
    %1490 = vmatpush1.msra.mxu0 %v438
    %1491 = vmatprep.subr.mxu0 0.0
    %1492 = vmatpush1.msra.mxu0 %v439
    %1493 = vmatprep.subr.mxu0 0.0
    %1494 = vmatpush1.msra.mxu0 %v440
    %1495 = vmatprep.subr.mxu0 0.0
    %1496 = vmatpush1.msra.mxu0 %v441
    %1497 = vmatprep.subr.mxu0 0.0
    %1498 = vmatpush1.msra.mxu0 %v442
    %1499 = vmatprep.subr.mxu0 0.0
    %1500 = vmatpush1.msra.mxu0 %v443
    %1501 = vmatprep.subr.mxu0 0.0
    %1502 = vmatpush1.msra.mxu0 0.0
    %1503 = vmatprep.subr.mxu0 0.0
    %1504 = vmatpush1.msra.mxu0 0.0
    %1505 = vmatprep.subr.mxu0 0.0
    %1506 = vmatpush1.msra.mxu0 0.0
    %1507 = vmatprep.subr.mxu0 0.0
    %1508 = vmatpush1.msra.mxu0 0.0
    %1509 = vmatprep.subr.mxu0 0.0
    %1510 = vmatpush1.msra.mxu0 0.0
    %1511 = vmatprep.subr.mxu0 0.0
    %1512 = vmatpush1.msra.mxu0 0.0
    %1513 = vmatprep.subr.mxu0 0.0
    %1514 = vmatpush1.msra.mxu0 0.0
    %1515 = vmatprep.subr.mxu0 0.0
    %1516 = vmatpush1.msra.mxu0 0.0
    %1517 = vmatprep.subr.mxu0 0.0
    %1518 = vmatpush1.msra.mxu0 0.0
    %1519 = vmatprep.subr.mxu0 0.0
    %1520 = vmatpush1.msra.mxu0 0.0
    %1521 = vmatprep.subr.mxu0 0.0
    %1522 = vmatpush1.msra.mxu0 0.0
    %1523 = vmatprep.subr.mxu0 0.0
    %1524 = vmatpush1.msra.mxu0 0.0
    %1525 = vmatprep.subr.mxu0 0.0
    %1526 = vmatpush1.msra.mxu0 0.0
    %1527 = vmatprep.subr.mxu0 0.0
    %1528 = vmatpush1.msra.mxu0 0.0
    %1529 = vmatprep.subr.mxu0 0.0
    %1530 = vmatpush1.msra.mxu0 0.0
    %1531 = vmatprep.subr.mxu0 0.0
    %1532 = vmatpush1.msra.mxu0 0.0
    %1533 = vmatprep.mubr.f32.mxu0 0.0
    %1534 = vmatmul.mubr.f32.gmra.mrb[0].mxu0 %v1468
    %v1535 = vpop.f32.mrb[0].mxu0
    %v1536 = vadd.f32 %v1389, %v1535
    %v1537 = vpop.f32.mrb[0].mxu0
    %1538 = vdwg.mxu0
    %v1539 = vtanh.pop %v1536
    %v1540 = vsub.f32 %v1539, %v1385
    %v1541 = vmul.f32 %v1466, %v1540
    %v1542 = vadd.f32 %v1385, %v1541
    %s1543 = scalar_lea.vmem [#allocation2], 168
    %v1544 = vld [vmem:[%s1543] sm:$0xff]
    %v1545 = vld [vmem:[%s1543 + $0x8] sm:$0xff]
    %v1546 = vld [vmem:[%s1543 + $0x10] sm:$0xff]
    %1547 = vmatprep.subr.mxu0 %v397
    %1548 = vmatpush1.msra.mxu0 %v396
    %1549 = vmatprep.subr.mxu0 %v399
    %1550 = vmatpush1.msra.mxu0 %v398
    %1551 = vmatprep.subr.mxu0 %v401
    %1552 = vmatpush1.msra.mxu0 %v400
    %1553 = vmatprep.subr.mxu0 %v403
    %1554 = vmatpush1.msra.mxu0 %v402
    %1555 = vmatprep.subr.mxu0 %v405
    %1556 = vmatpush1.msra.mxu0 %v404
    %1557 = vmatprep.subr.mxu0 %v407
    %1558 = vmatpush1.msra.mxu0 %v406
    %1559 = vmatprep.subr.mxu0 %v409
    %1560 = vmatpush1.msra.mxu0 %v408
    %1561 = vmatprep.subr.mxu0 %v411
    %1562 = vmatpush1.msra.mxu0 %v410
    %1563 = vmatprep.subr.mxu0 %v413
    %1564 = vmatpush1.msra.mxu0 %v412
    %1565 = vmatprep.subr.mxu0 %v415
    %1566 = vmatpush1.msra.mxu0 %v414
    %1567 = vmatprep.subr.mxu0 %v417
    %1568 = vmatpush1.msra.mxu0 %v416
    %1569 = vmatprep.subr.mxu0 %v419
    %1570 = vmatpush1.msra.mxu0 %v418
    %1571 = vmatprep.subr.mxu0 %v421
    %1572 = vmatpush1.msra.mxu0 %v420
    %1573 = vmatprep.subr.mxu0 %v423
    %1574 = vmatpush1.msra.mxu0 %v422
    %1575 = vmatprep.subr.mxu0 %v425
    %1576 = vmatpush1.msra.mxu0 %v424
    %1577 = vmatprep.subr.mxu0 %v427
    %1578 = vmatpush1.msra.mxu0 %v426
    %1579 = vmatprep.subr.mxu0 0.0
    %1580 = vmatpush1.msra.mxu0 0.0
    %1581 = vmatprep.subr.mxu0 0.0
    %1582 = vmatpush1.msra.mxu0 0.0
    %1583 = vmatprep.subr.mxu0 0.0
    %1584 = vmatpush1.msra.mxu0 0.0
    %1585 = vmatprep.subr.mxu0 0.0
    %1586 = vmatpush1.msra.mxu0 0.0
    %1587 = vmatprep.subr.mxu0 0.0
    %1588 = vmatpush1.msra.mxu0 0.0
    %1589 = vmatprep.subr.mxu0 0.0
    %1590 = vmatpush1.msra.mxu0 0.0
    %1591 = vmatprep.subr.mxu0 0.0
    %1592 = vmatpush1.msra.mxu0 0.0
    %1593 = vmatprep.subr.mxu0 0.0
    %1594 = vmatpush1.msra.mxu0 0.0
    %1595 = vmatprep.subr.mxu0 0.0
    %1596 = vmatpush1.msra.mxu0 0.0
    %1597 = vmatprep.subr.mxu0 0.0
    %1598 = vmatpush1.msra.mxu0 0.0
    %1599 = vmatprep.subr.mxu0 0.0
    %1600 = vmatpush1.msra.mxu0 0.0
    %1601 = vmatprep.subr.mxu0 0.0
    %1602 = vmatpush1.msra.mxu0 0.0
    %1603 = vmatprep.subr.mxu0 0.0
    %1604 = vmatpush1.msra.mxu0 0.0
    %1605 = vmatprep.subr.mxu0 0.0
    %1606 = vmatpush1.msra.mxu0 0.0
    %1607 = vmatprep.subr.mxu0 0.0
    %1608 = vmatpush1.msra.mxu0 0.0
    %1609 = vmatprep.subr.mxu0 0.0
    %1610 = vmatpush1.msra.mxu0 0.0
    %1611 = vmatprep.mubr.f32.mxu0 0.0
    %1612 = vmatmul.mubr.f32.gmra.mrb[0].mxu0 %v1542
    %v1613 = vpop.f32.mrb[0].mxu0
    %v1614 = vadd.f32 %v1544, %v1613
    %v1615 = vpop.f32.mrb[0].mxu0
    %v1616 = vadd.f32 %v1545, %v1615
    %1617 = vdwg.mxu0
    %v1618 = vxor.u32 %v1614, 2147483648
    %v1619 = vmul.f32 %v1618, 1.442695
    %v1620 = vpow.pop %v1619
    %v1621 = vadd.f32 %v1620, 1.0
    %v1622 = vrcp.pop %v1621
    %v1623 = vmul.f32 1.0, %v1622
    %v1624 = vtanh.pop %v1616
    %v1625 = vmul.f32 %v1624, %v1542
    %1626 = vmatprep.subr.mxu0 0.0
    %1627 = vmatpush1.msra.mxu0 %v428
    %1628 = vmatprep.subr.mxu0 0.0
    %1629 = vmatpush1.msra.mxu0 %v429
    %1630 = vmatprep.subr.mxu0 0.0
    %1631 = vmatpush1.msra.mxu0 %v430
    %1632 = vmatprep.subr.mxu0 0.0
    %1633 = vmatpush1.msra.mxu0 %v431
    %1634 = vmatprep.subr.mxu0 0.0
    %1635 = vmatpush1.msra.mxu0 %v432
    %1636 = vmatprep.subr.mxu0 0.0
    %1637 = vmatpush1.msra.mxu0 %v433
    %1638 = vmatprep.subr.mxu0 0.0
    %1639 = vmatpush1.msra.mxu0 %v434
    %1640 = vmatprep.subr.mxu0 0.0
    %1641 = vmatpush1.msra.mxu0 %v435
    %1642 = vmatprep.subr.mxu0 0.0
    %1643 = vmatpush1.msra.mxu0 %v436
    %1644 = vmatprep.subr.mxu0 0.0
    %1645 = vmatpush1.msra.mxu0 %v437
    %1646 = vmatprep.subr.mxu0 0.0
    %1647 = vmatpush1.msra.mxu0 %v438
    %1648 = vmatprep.subr.mxu0 0.0
    %1649 = vmatpush1.msra.mxu0 %v439
    %1650 = vmatprep.subr.mxu0 0.0
    %1651 = vmatpush1.msra.mxu0 %v440
    %1652 = vmatprep.subr.mxu0 0.0
    %1653 = vmatpush1.msra.mxu0 %v441
    %1654 = vmatprep.subr.mxu0 0.0
    %1655 = vmatpush1.msra.mxu0 %v442
    %1656 = vmatprep.subr.mxu0 0.0
    %1657 = vmatpush1.msra.mxu0 %v443
    %1658 = vmatprep.subr.mxu0 0.0
    %1659 = vmatpush1.msra.mxu0 0.0
    %1660 = vmatprep.subr.mxu0 0.0
    %1661 = vmatpush1.msra.mxu0 0.0
    %1662 = vmatprep.subr.mxu0 0.0
    %1663 = vmatpush1.msra.mxu0 0.0
    %1664 = vmatprep.subr.mxu0 0.0
    %1665 = vmatpush1.msra.mxu0 0.0
    %1666 = vmatprep.subr.mxu0 0.0
    %1667 = vmatpush1.msra.mxu0 0.0
    %1668 = vmatprep.subr.mxu0 0.0
    %1669 = vmatpush1.msra.mxu0 0.0
    %1670 = vmatprep.subr.mxu0 0.0
    %1671 = vmatpush1.msra.mxu0 0.0
    %1672 = vmatprep.subr.mxu0 0.0
    %1673 = vmatpush1.msra.mxu0 0.0
    %1674 = vmatprep.subr.mxu0 0.0
    %1675 = vmatpush1.msra.mxu0 0.0
    %1676 = vmatprep.subr.mxu0 0.0
    %1677 = vmatpush1.msra.mxu0 0.0
    %1678 = vmatprep.subr.mxu0 0.0
    %1679 = vmatpush1.msra.mxu0 0.0
    %1680 = vmatprep.subr.mxu0 0.0
    %1681 = vmatpush1.msra.mxu0 0.0
    %1682 = vmatprep.subr.mxu0 0.0
    %1683 = vmatpush1.msra.mxu0 0.0
    %1684 = vmatprep.subr.mxu0 0.0
    %1685 = vmatpush1.msra.mxu0 0.0
    %1686 = vmatprep.subr.mxu0 0.0
    %1687 = vmatpush1.msra.mxu0 0.0
    %1688 = vmatprep.subr.mxu0 0.0
    %1689 = vmatpush1.msra.mxu0 0.0
    %1690 = vmatprep.mubr.f32.mxu0 0.0
    %1691 = vmatmul.mubr.f32.gmra.mrb[0].mxu0 %v1625
    %v1692 = vpop.f32.mrb[0].mxu0
    %v1693 = vadd.f32 %v1546, %v1692
    %v1694 = vpop.f32.mrb[0].mxu0
    %1695 = vdwg.mxu0
    %v1696 = vtanh.pop %v1693
    %v1697 = vsub.f32 %v1696, %v1542
    %v1698 = vmul.f32 %v1623, %v1697
    %v1699 = vadd.f32 %v1542, %v1698
    %1700 = vst [vmem:[#allocation11] sm:$0xff] %v1699
    // Predicated region
    $region42: #{tpu_custom_call.1} parent=1 // pred_check
      _
    $region43: #{tpu_custom_call.1} parent=1 // pred_check_branch
      %1702 = sbr.rel (0) target = $region45
    $region44: #{tpu_custom_call.1} parent=1 // pred_region
      %s1704 = ssub.s32 128, 128
      %1705 = vsyncadd [#allocation5], %s1704
      %s1707 = sshll.u32 [#allocation11], 4
      %s1708 = int_to_ptr.vmem [resolvable:$true] %s1707
      %1710 = dma.vmem_to_hbm [thread:$0]  %s1708, 128, %s5, [#allocation5]
    $region45: #{tpu_custom_call.1} parent=1 // pred_fallthru
      _
    // Predicated region
    $region46: #{tpu_custom_call.1} parent=1 // pred_check
      _
    $region47: #{tpu_custom_call.1} parent=1 // pred_check_branch
      %1712 = sbr.rel (0) target = $region49
    $region48: #{tpu_custom_call.1} parent=1 // pred_region
      %1713 = dma.done [#allocation5], 128
    $region49: #{tpu_custom_call.1} parent=1 // pred_fallthru
      _
    %1714 = vsyncpa [#allocation4], 1
    %1715 = vsyncpa [#allocation7], 1
    %1716 = vsyncpa [#allocation10], 1
    %1717 = vsyncpa [#allocation5], 1

</llo_original>
